<compile_context>
chip_gen: v7x
topology: tpu7x:2x2x1
jax: 0.10.0
libtpu: 0.0.40
codegen_flags: <defaults>
</compile_context>

<pallas_src>
import numpy as np
import jax
import jax.numpy as jnp
from jax.experimental import pallas as pl
from jax.experimental.pallas import tpu as pltpu

EPS = 1e-5
H_IN = 130          # input length along H; makes the final feature map 10*16
LANE = 128          # lane width (last-dim alignment)
TILE_B = 8          # batch rows per grid step (multiple of 8 = f32 sublane)


def _round_up(n, m):
    return ((n + m - 1) // m) * m


def _conv_to_dense(w, stride_h, h_in):
    """Lower a (O, I, KH, 1) OIHW conv weight (valid padding, stride_h along H,
    trivial W axis) into a dense matrix T such that y_flat = x_flat @ T, with
    flat index = c * H + h (NCH order)."""
    o_c, i_c, k_h, _ = w.shape
    h_out = (h_in - k_h) // stride_h + 1
    T = np.zeros((i_c * h_in, o_c * h_out), dtype=np.float32)
    for o in range(o_c):
        for i in range(i_c):
            for h in range(h_out):
                for k in range(k_h):
                    T[i * h_in + stride_h * h + k, o * h_out + h] += float(w[o, i, k, 0])
    return T, h_out


def _pad2(a, rows, cols):
    out = np.zeros((rows, cols), dtype=np.float32)
    out[: a.shape[0], : a.shape[1]] = a
    return out


# ----------------------------- Pallas kernel ------------------------------ #
def _iegm_kernel(x_ref,
                 t1, b1, t2, b2, t3, b3, t4, b4, t5, b5,
                 wl, bl,
                 out_ref):
    y = x_ref[...]                                                 # (TB, 256) f32
    for t_r, b_r in ((t1, b1), (t2, b2), (t3, b3), (t4, b4), (t5, b5)):
        y = jnp.maximum(
            jnp.dot(y, t_r[...], preferred_element_type=jnp.float32) + b_r[...],
            0.0)                                                   # conv+bias+ReLU
    out_ref[...] = (jnp.dot(y, wl[...], preferred_element_type=jnp.float32)
                    + bl[...])                                     # linear (BN5 folded)


def iegm_forward_pallas(x_nchw, kernel_args, tile_b=TILE_B):
    b = x_nchw.shape[0]
    x_flat = jnp.reshape(x_nchw, (b, -1)).astype(jnp.float32)      # (B, 130) NCH order
    k_in = x_flat.shape[1]
    k_pad = _round_up(k_in, LANE)                                  # 256 lanes
    b_pad = _round_up(b, tile_b)
    x_pad = jnp.zeros((b_pad, k_pad), jnp.float32).at[:b, :k_in].set(x_flat)

    n_out_pad = kernel_args[-1].shape[-1]                          # 128 (lane-dense out)

    weight_specs = [pl.BlockSpec(a.shape, lambda i: (0, 0)) for a in kernel_args]

    flops = 2 * b_pad * sum(int(t.shape[0]) * int(t.shape[1])
                            for t in kernel_args[0::2])
    weight_bytes = sum(int(np.prod(a.shape)) * 4 for a in kernel_args)
    bytes_accessed = b_pad * (k_pad + n_out_pad) * 4 + weight_bytes

    out = pl.pallas_call(
        _iegm_kernel,
        out_shape=jax.ShapeDtypeStruct((b_pad, n_out_pad), jnp.float32),
        grid=(b_pad // tile_b,),
        in_specs=[pl.BlockSpec((tile_b, k_pad), lambda i: (i, 0))] + weight_specs,
        out_specs=pl.BlockSpec((tile_b, n_out_pad), lambda i: (i, 0)),
        compiler_params=pltpu.CompilerParams(
            dimension_semantics=("parallel",)),
        cost_estimate=pl.CostEstimate(
            flops=flops, transcendentals=0, bytes_accessed=bytes_accessed),
    )(x_pad, *kernel_args)
    return out[:b, :2]


# --------------------------- parameter handling ---------------------------- #
def init_params(key):
    w_specs = {
        "w1": (2, 1, 2, 1), "b1": (2,),
        "w2": (3, 2, 3, 1), "b2": (3,),
        "w3": (5, 3, 2, 1), "b3": (5,),
        "w4": (10, 5, 1, 1), "b4": (10,),
        "w5": (10, 10, 1, 1), "b5": (10,),
        "wl": (2, 160), "bl": (2,),
    }
    bn_channels = {"bn1": 2, "bn2": 3, "bn3": 5, "bn4": 10, "bn5": 10}
    keys = jax.random.split(key, len(w_specs) + 4 * len(bn_channels))
    p, ki = {}, 0
    for name, shape in w_specs.items():
        p[name] = 0.3 * jax.random.normal(keys[ki], shape, jnp.float32); ki += 1
    for name, c in bn_channels.items():
        p[name + "_gamma"] = 1.0 + 0.2 * jax.random.normal(keys[ki], (c,), jnp.float32); ki += 1
        p[name + "_beta"] = 0.2 * jax.random.normal(keys[ki], (c,), jnp.float32); ki += 1
        p[name + "_mean"] = 0.2 * jax.random.normal(keys[ki], (c,), jnp.float32); ki += 1
        p[name + "_var"] = jax.random.uniform(keys[ki], (c,), jnp.float32, 0.5, 1.5); ki += 1
    return p


def build_kernel_params(p):
    """Toeplitz-lower the convs, fold each BN (eval mode) into the NEXT layer's
    matrix/bias, and zero-pad everything to (8,128)-aligned shapes."""
    layers = [("w1", "b1", "bn1", 2),
              ("w2", "b2", "bn2", 2),
              ("w3", "b3", "bn3", 2),
              ("w4", "b4", "bn4", 1),   # torch stride (1,2): H-stride 1, W trivial
              ("w5", "b5", "bn5", 1)]
    mats, biases = [], []
    h = H_IN
    prev_scale, prev_shift = None, None     # previous layer's BN affine (per flat feat)
    for wname, bname, bnname, stride in layers:
        T, h = _conv_to_dense(np.asarray(p[wname]), stride, h)
        bias = np.repeat(np.asarray(p[bname], dtype=np.float32), h)
        if prev_scale is not None:          # fold previous BN into this layer
            bias = prev_shift @ T + bias
            T = prev_scale[:, None] * T
        mats.append(T)
        biases.append(bias)
        gamma = np.asarray(p[bnname + "_gamma"], np.float32)
        beta = np.asarray(p[bnname + "_beta"], np.float32)
        mean = np.asarray(p[bnname + "_mean"], np.float32)
        var = np.asarray(p[bnname + "_var"], np.float32)
        sc = gamma / np.sqrt(var + EPS)
        sh = beta - mean * sc
        prev_scale = np.repeat(sc, h)
        prev_shift = np.repeat(sh, h)

    # final Linear with BN5 folded in
    wl = np.asarray(p["wl"], np.float32).T          # (160, 2)
    bl = np.asarray(p["bl"], np.float32)
    bl = prev_shift @ wl + bl
    wl = prev_scale[:, None] * wl
    mats.append(wl)
    biases.append(bl)

    # pad: K of each layer = padded N of the previous activation; N -> mult of 128
    args = []
    k_pad = _round_up(H_IN, LANE)                   # padded input width (256)
    for T, b in zip(mats, biases):
        n_pad = _round_up(T.shape[1], LANE)
        args.append(jnp.asarray(_pad2(T, k_pad, n_pad)))
        args.append(jnp.asarray(_pad2(b[None, :], 1, n_pad)))
        k_pad = n_pad
    return args


# ------------------------- pure-JAX reference ------------------------------ #
def reference_forward(x, p):
    def block(y, w, b, bn, strides):
        y = jax.lax.conv_general_dilated(y, p[w], window_strides=strides,
                                         padding="VALID",
                                         dimension_numbers=("NCHW", "OIHW", "NCHW"))
        y = y + p[b][None, :, None, None]
        y = jnp.maximum(y, 0.0)
        g = p[bn + "_gamma"][None, :, None, None]
        be = p[bn + "_beta"][None, :, None, None]
        m = p[bn + "_mean"][None, :, None, None]
        v = p[bn + "_var"][None, :, None, None]
        return (y - m) / jnp.sqrt(v + EPS) * g + be

    y = block(x, "w1", "b1", "bn1", (2, 1))
    y = block(y, "w2", "b2", "bn2", (2, 1))
    y = block(y, "w3", "b3", "bn3", (2, 1))
    y = block(y, "w4", "b4", "bn4", (1, 2))
    y = block(y, "w5", "b5", "bn5", (1, 1))
    y = y.reshape(-1, 10 * 16)
    return y @ p["wl"].T + p["bl"][None, :]


if __name__ == "__main__":
    key = jax.random.PRNGKey(0)
    kx, kp = jax.random.split(key)
    B = 16                                               # small batch; grid = (2,)
    x = jax.random.normal(kx, (B, 1, H_IN, 1), jnp.float32)   # NCHW, W=1 (IEGM signal)
    params = init_params(kp)
    kargs = build_kernel_params(params)

    out = iegm_forward_pallas(x, kargs)
    out = jax.block_until_ready(out)
    assert out.shape == (B, 2)

    ref = reference_forward(x, params)
    np.testing.assert_allclose(np.asarray(out), np.asarray(ref), rtol=1e-3, atol=1e-3)
    print("KERNEL_OK")
</pallas_src>

<mosaic_0001>
module attributes {stable_mosaic.version = 11 : i64} {
  func.func @_iegm_kernel(%arg0: i32, %arg1: memref<8x256xf32, #tpu.memory_space<vmem>>, %arg2: memref<256x256xf32, #tpu.memory_space<vmem>>, %arg3: memref<1x256xf32, #tpu.memory_space<vmem>>, %arg4: memref<256x128xf32, #tpu.memory_space<vmem>>, %arg5: memref<1x128xf32, #tpu.memory_space<vmem>>, %arg6: memref<128x128xf32, #tpu.memory_space<vmem>>, %arg7: memref<1x128xf32, #tpu.memory_space<vmem>>, %arg8: memref<128x256xf32, #tpu.memory_space<vmem>>, %arg9: memref<1x256xf32, #tpu.memory_space<vmem>>, %arg10: memref<256x256xf32, #tpu.memory_space<vmem>>, %arg11: memref<1x256xf32, #tpu.memory_space<vmem>>, %arg12: memref<256x128xf32, #tpu.memory_space<vmem>>, %arg13: memref<1x128xf32, #tpu.memory_space<vmem>>, %arg14: memref<8x128xf32, #tpu.memory_space<vmem>>) attributes {dimension_semantics = [#tpu.dimension_semantics<parallel>], iteration_bounds = array<i64: 2>, scalar_prefetch = 0 : i64, scratch_operands = 0 : i64, tpu.core_type = #tpu.core_type<tc>, window_params = [{transform_indices = @transform_0, window_bounds = array<i64: 8, 256>}, {pipeline_mode = #tpu.pipeline_mode<synchronous>, transform_indices = @transform_1, window_bounds = array<i64: 256, 256>}, {pipeline_mode = #tpu.pipeline_mode<synchronous>, transform_indices = @transform_2, window_bounds = array<i64: 1, 256>}, {pipeline_mode = #tpu.pipeline_mode<synchronous>, transform_indices = @transform_3, window_bounds = array<i64: 256, 128>}, {pipeline_mode = #tpu.pipeline_mode<synchronous>, transform_indices = @transform_4, window_bounds = array<i64: 1, 128>}, {pipeline_mode = #tpu.pipeline_mode<synchronous>, transform_indices = @transform_5, window_bounds = array<i64: 128, 128>}, {pipeline_mode = #tpu.pipeline_mode<synchronous>, transform_indices = @transform_6, window_bounds = array<i64: 1, 128>}, {pipeline_mode = #tpu.pipeline_mode<synchronous>, transform_indices = @transform_7, window_bounds = array<i64: 128, 256>}, {pipeline_mode = #tpu.pipeline_mode<synchronous>, transform_indices = @transform_8, window_bounds = array<i64: 1, 256>}, {pipeline_mode = #tpu.pipeline_mode<synchronous>, transform_indices = @transform_9, window_bounds = array<i64: 256, 256>}, {pipeline_mode = #tpu.pipeline_mode<synchronous>, transform_indices = @transform_10, window_bounds = array<i64: 1, 256>}, {pipeline_mode = #tpu.pipeline_mode<synchronous>, transform_indices = @transform_11, window_bounds = array<i64: 256, 128>}, {pipeline_mode = #tpu.pipeline_mode<synchronous>, transform_indices = @transform_12, window_bounds = array<i64: 1, 128>}, {transform_indices = @transform_13, window_bounds = array<i64: 8, 128>}]} {
    %c0 = arith.constant 0 : index
    %c0_0 = arith.constant 0 : index
    %0 = vector.load %arg1[%c0, %c0_0] : memref<8x256xf32, #tpu.memory_space<vmem>>, vector<8x256xf32>
    %c0_1 = arith.constant 0 : index
    %c0_2 = arith.constant 0 : index
    %1 = vector.load %arg2[%c0_1, %c0_2] : memref<256x256xf32, #tpu.memory_space<vmem>>, vector<256x256xf32>
    %cst = arith.constant dense<0.000000e+00> : vector<8x256xf32>
    %2 = tpu.matmul %0, %1, %cst {dimension_numbers = #tpu.dot_dimension_numbers<[1], [0], [0], [1], [0, 0, 1, 1], [], []>} : vector<8x256xf32>, vector<256x256xf32>, vector<8x256xf32> -> vector<8x256xf32>
    %c0_3 = arith.constant 0 : index
    %c0_4 = arith.constant 0 : index
    %3 = vector.load %arg3[%c0_3, %c0_4] : memref<1x256xf32, #tpu.memory_space<vmem>>, vector<1x256xf32>
    %4 = vector.broadcast %3 : vector<1x256xf32> to vector<8x256xf32>
    %5 = arith.addf %2, %4 : vector<8x256xf32>
    %cst_5 = arith.constant 0.000000e+00 : f32
    %6 = vector.broadcast %cst_5 : f32 to vector<8x256xf32>
    %7 = arith.maximumf %5, %6 : vector<8x256xf32>
    %c0_6 = arith.constant 0 : index
    %c0_7 = arith.constant 0 : index
    %8 = vector.load %arg4[%c0_6, %c0_7] : memref<256x128xf32, #tpu.memory_space<vmem>>, vector<256x128xf32>
    %cst_8 = arith.constant dense<0.000000e+00> : vector<8x128xf32>
    %9 = tpu.matmul %7, %8, %cst_8 {dimension_numbers = #tpu.dot_dimension_numbers<[1], [0], [0], [1], [0, 0, 1, 1], [], []>} : vector<8x256xf32>, vector<256x128xf32>, vector<8x128xf32> -> vector<8x128xf32>
    %c0_9 = arith.constant 0 : index
    %c0_10 = arith.constant 0 : index
    %10 = vector.load %arg5[%c0_9, %c0_10] : memref<1x128xf32, #tpu.memory_space<vmem>>, vector<1x128xf32>
    %11 = vector.broadcast %10 : vector<1x128xf32> to vector<8x128xf32>
    %12 = arith.addf %9, %11 : vector<8x128xf32>
    %cst_11 = arith.constant 0.000000e+00 : f32
    %13 = vector.broadcast %cst_11 : f32 to vector<8x128xf32>
    %14 = arith.maximumf %12, %13 : vector<8x128xf32>
    %c0_12 = arith.constant 0 : index
    %c0_13 = arith.constant 0 : index
    %15 = vector.load %arg6[%c0_12, %c0_13] : memref<128x128xf32, #tpu.memory_space<vmem>>, vector<128x128xf32>
    %cst_14 = arith.constant dense<0.000000e+00> : vector<8x128xf32>
    %16 = tpu.matmul %14, %15, %cst_14 {dimension_numbers = #tpu.dot_dimension_numbers<[1], [0], [0], [1], [0, 0, 1, 1], [], []>} : vector<8x128xf32>, vector<128x128xf32>, vector<8x128xf32> -> vector<8x128xf32>
    %c0_15 = arith.constant 0 : index
    %c0_16 = arith.constant 0 : index
    %17 = vector.load %arg7[%c0_15, %c0_16] : memref<1x128xf32, #tpu.memory_space<vmem>>, vector<1x128xf32>
    %18 = vector.broadcast %17 : vector<1x128xf32> to vector<8x128xf32>
    %19 = arith.addf %16, %18 : vector<8x128xf32>
    %cst_17 = arith.constant 0.000000e+00 : f32
    %20 = vector.broadcast %cst_17 : f32 to vector<8x128xf32>
    %21 = arith.maximumf %19, %20 : vector<8x128xf32>
    %c0_18 = arith.constant 0 : index
    %c0_19 = arith.constant 0 : index
    %22 = vector.load %arg8[%c0_18, %c0_19] : memref<128x256xf32, #tpu.memory_space<vmem>>, vector<128x256xf32>
    %cst_20 = arith.constant dense<0.000000e+00> : vector<8x256xf32>
    %23 = tpu.matmul %21, %22, %cst_20 {dimension_numbers = #tpu.dot_dimension_numbers<[1], [0], [0], [1], [0, 0, 1, 1], [], []>} : vector<8x128xf32>, vector<128x256xf32>, vector<8x256xf32> -> vector<8x256xf32>
    %c0_21 = arith.constant 0 : index
    %c0_22 = arith.constant 0 : index
    %24 = vector.load %arg9[%c0_21, %c0_22] : memref<1x256xf32, #tpu.memory_space<vmem>>, vector<1x256xf32>
    %25 = vector.broadcast %24 : vector<1x256xf32> to vector<8x256xf32>
    %26 = arith.addf %23, %25 : vector<8x256xf32>
    %cst_23 = arith.constant 0.000000e+00 : f32
    %27 = vector.broadcast %cst_23 : f32 to vector<8x256xf32>
    %28 = arith.maximumf %26, %27 : vector<8x256xf32>
    %c0_24 = arith.constant 0 : index
    %c0_25 = arith.constant 0 : index
    %29 = vector.load %arg10[%c0_24, %c0_25] : memref<256x256xf32, #tpu.memory_space<vmem>>, vector<256x256xf32>
    %cst_26 = arith.constant dense<0.000000e+00> : vector<8x256xf32>
    %30 = tpu.matmul %28, %29, %cst_26 {dimension_numbers = #tpu.dot_dimension_numbers<[1], [0], [0], [1], [0, 0, 1, 1], [], []>} : vector<8x256xf32>, vector<256x256xf32>, vector<8x256xf32> -> vector<8x256xf32>
    %c0_27 = arith.constant 0 : index
    %c0_28 = arith.constant 0 : index
    %31 = vector.load %arg11[%c0_27, %c0_28] : memref<1x256xf32, #tpu.memory_space<vmem>>, vector<1x256xf32>
    %32 = vector.broadcast %31 : vector<1x256xf32> to vector<8x256xf32>
    %33 = arith.addf %30, %32 : vector<8x256xf32>
    %cst_29 = arith.constant 0.000000e+00 : f32
    %34 = vector.broadcast %cst_29 : f32 to vector<8x256xf32>
    %35 = arith.maximumf %33, %34 : vector<8x256xf32>
    %c0_30 = arith.constant 0 : index
    %c0_31 = arith.constant 0 : index
    %36 = vector.load %arg12[%c0_30, %c0_31] : memref<256x128xf32, #tpu.memory_space<vmem>>, vector<256x128xf32>
    %cst_32 = arith.constant dense<0.000000e+00> : vector<8x128xf32>
    %37 = tpu.matmul %35, %36, %cst_32 {dimension_numbers = #tpu.dot_dimension_numbers<[1], [0], [0], [1], [0, 0, 1, 1], [], []>} : vector<8x256xf32>, vector<256x128xf32>, vector<8x128xf32> -> vector<8x128xf32>
    %c0_33 = arith.constant 0 : index
    %c0_34 = arith.constant 0 : index
    %38 = vector.load %arg13[%c0_33, %c0_34] : memref<1x128xf32, #tpu.memory_space<vmem>>, vector<1x128xf32>
    %39 = vector.broadcast %38 : vector<1x128xf32> to vector<8x128xf32>
    %40 = arith.addf %37, %39 : vector<8x128xf32>
    %c0_35 = arith.constant 0 : index
    %c0_36 = arith.constant 0 : index
    %41 = vector.load %arg14[%c0_35, %c0_36] : memref<8x128xf32, #tpu.memory_space<vmem>>, vector<8x128xf32>
    tpu.vector_store %arg14[%c0_35, %c0_36], %40 {strides = array<i32>} : memref<8x128xf32, #tpu.memory_space<vmem>>, vector<8x128xf32>,
    return
  }
  func.func @transform_0(%arg0: i32) -> (i32, i32) {
    %c0_i32 = arith.constant 0 : i32
    %c0_i32_0 = arith.constant 0 : i32
    return %arg0, %c0_i32 : i32, i32
  }
  func.func @transform_1(%arg0: i32) -> (i32, i32) {
    %c0_i32 = arith.constant 0 : i32
    %c0_i32_0 = arith.constant 0 : i32
    %c0_i32_1 = arith.constant 0 : i32
    return %c0_i32, %c0_i32_0 : i32, i32
  }
  func.func @transform_2(%arg0: i32) -> (i32, i32) {
    %c0_i32 = arith.constant 0 : i32
    %c0_i32_0 = arith.constant 0 : i32
    %c0_i32_1 = arith.constant 0 : i32
    return %c0_i32, %c0_i32_0 : i32, i32
  }
  func.func @transform_3(%arg0: i32) -> (i32, i32) {
    %c0_i32 = arith.constant 0 : i32
    %c0_i32_0 = arith.constant 0 : i32
    %c0_i32_1 = arith.constant 0 : i32
    return %c0_i32, %c0_i32_0 : i32, i32
  }
  func.func @transform_4(%arg0: i32) -> (i32, i32) {
    %c0_i32 = arith.constant 0 : i32
    %c0_i32_0 = arith.constant 0 : i32
    %c0_i32_1 = arith.constant 0 : i32
    return %c0_i32, %c0_i32_0 : i32, i32
  }
  func.func @transform_5(%arg0: i32) -> (i32, i32) {
    %c0_i32 = arith.constant 0 : i32
    %c0_i32_0 = arith.constant 0 : i32
    %c0_i32_1 = arith.constant 0 : i32
    return %c0_i32, %c0_i32_0 : i32, i32
  }
  func.func @transform_6(%arg0: i32) -> (i32, i32) {
    %c0_i32 = arith.constant 0 : i32
    %c0_i32_0 = arith.constant 0 : i32
    %c0_i32_1 = arith.constant 0 : i32
    return %c0_i32, %c0_i32_0 : i32, i32
  }
  func.func @transform_7(%arg0: i32) -> (i32, i32) {
    %c0_i32 = arith.constant 0 : i32
    %c0_i32_0 = arith.constant 0 : i32
    %c0_i32_1 = arith.constant 0 : i32
    return %c0_i32, %c0_i32_0 : i32, i32
  }
  func.func @transform_8(%arg0: i32) -> (i32, i32) {
    %c0_i32 = arith.constant 0 : i32
    %c0_i32_0 = arith.constant 0 : i32
    %c0_i32_1 = arith.constant 0 : i32
    return %c0_i32, %c0_i32_0 : i32, i32
  }
  func.func @transform_9(%arg0: i32) -> (i32, i32) {
    %c0_i32 = arith.constant 0 : i32
    %c0_i32_0 = arith.constant 0 : i32
    %c0_i32_1 = arith.constant 0 : i32
    return %c0_i32, %c0_i32_0 : i32, i32
  }
  func.func @transform_10(%arg0: i32) -> (i32, i32) {
    %c0_i32 = arith.constant 0 : i32
    %c0_i32_0 = arith.constant 0 : i32
    %c0_i32_1 = arith.constant 0 : i32
    return %c0_i32, %c0_i32_0 : i32, i32
  }
  func.func @transform_11(%arg0: i32) -> (i32, i32) {
    %c0_i32 = arith.constant 0 : i32
    %c0_i32_0 = arith.constant 0 : i32
    %c0_i32_1 = arith.constant 0 : i32
    return %c0_i32, %c0_i32_0 : i32, i32
  }
  func.func @transform_12(%arg0: i32) -> (i32, i32) {
    %c0_i32 = arith.constant 0 : i32
    %c0_i32_0 = arith.constant 0 : i32
    %c0_i32_1 = arith.constant 0 : i32
    return %c0_i32, %c0_i32_0 : i32, i32
  }
  func.func @transform_13(%arg0: i32) -> (i32, i32) {
    %c0_i32 = arith.constant 0 : i32
    %c0_i32_0 = arith.constant 0 : i32
    return %arg0, %c0_i32 : i32, i32
  }
}

</mosaic_0001>

<llo_original>
// kernel: tpu_custom_call.1
$region0: #{tpu_custom_call.1}
  #allocation0 [shape = 'u32[]', space=smem, size = 0x4, offset = 0x4, fixed_abs, tag = 'smem constant byte address 0x4 - core index']
  #allocation1 [shape = 'u32[144,128]{1,0:T(1,128)}', space=vmem, size = 0x12000, scoped, tag = 'internal scratch']
  %s0 = inlined_call_operand.hbm [shape: f32[16,256], index: 0, kind: input, shape index: {}]
  %s1 = inlined_call_operand.hbm [shape: f32[256,256], index: 1, kind: input, shape index: {}]
  %s2 = inlined_call_operand.vmem [shape: f32[1,256], index: 2, kind: input, shape index: {}]
  %s3 = inlined_call_operand.hbm [shape: f32[256,128], index: 3, kind: input, shape index: {}]
  %s4 = inlined_call_operand.vmem [shape: f32[1,128], index: 4, kind: input, shape index: {}]
  %s5 = inlined_call_operand.hbm [shape: f32[128,128], index: 5, kind: input, shape index: {}]
  %s6 = inlined_call_operand.vmem [shape: f32[1,128], index: 6, kind: input, shape index: {}]
  %s7 = inlined_call_operand.hbm [shape: f32[128,256], index: 7, kind: input, shape index: {}]
  %s8 = inlined_call_operand.vmem [shape: f32[1,256], index: 8, kind: input, shape index: {}]
  %s9 = inlined_call_operand.hbm [shape: f32[256,256], index: 9, kind: input, shape index: {}]
  %s10 = inlined_call_operand.vmem [shape: f32[1,256], index: 10, kind: input, shape index: {}]
  %s11 = inlined_call_operand.hbm [shape: f32[256,128], index: 11, kind: input, shape index: {}]
  %s12 = inlined_call_operand.vmem [shape: f32[1,128], index: 12, kind: input, shape index: {}]
  %s13 = inlined_call_operand.hbm [shape: f32[16,128], index: 13, kind: output, shape index: {}]
  %s14 = sld [smem:[#allocation0]]
  $region113: #{tpu_custom_call.1} parent=0
    _
  %s16 = ssub.s32 1, %s14
  %s17 = scalar_select 0, %s16, %s14
  $region1: #{tpu_custom_call.1} parent=0
    #allocation2 [shape = 'u8[16384]{0}', space=vmem, size = 0x4000, scoped, tag = 'input window, operand 0']
    #allocation3 [shape = 's32[2]{0}', space=sflag, size = 0x8, scoped, tag = 'scoped memory for tpu_custom_call.1']
    #allocation4 [shape = 's32[2]{0}', space=sflag, size = 0x8, scoped, tag = 'scoped memory for tpu_custom_call.1']
    #allocation5 [shape = 'u8[262144]{0}', space=vmem, size = 0x40000, scoped, tag = 'input window, operand 1, single buffered']
    #allocation6 [shape = 's32[1]{0}', space=sflag, size = 0x4, scoped, tag = 'scoped memory for tpu_custom_call.1']
    #allocation7 [shape = 'u8[131072]{0}', space=vmem, size = 0x20000, scoped, tag = 'input window, operand 3, single buffered']
    #allocation8 [shape = 'u8[65536]{0}', space=vmem, size = 0x10000, scoped, tag = 'input window, operand 5, single buffered']
    #allocation9 [shape = 's32[1]{0}', space=sflag, size = 0x4, scoped, tag = 'scoped memory for tpu_custom_call.1']
    #allocation10 [shape = 'u8[131072]{0}', space=vmem, size = 0x20000, scoped, tag = 'input window, operand 7, single buffered']
    #allocation11 [shape = 'u8[262144]{0}', space=vmem, size = 0x40000, scoped, tag = 'input window, operand 9, single buffered']
    #allocation12 [shape = 's32[1]{0}', space=sflag, size = 0x4, scoped, tag = 'scoped memory for tpu_custom_call.1']
    #allocation13 [shape = 'u8[131072]{0}', space=vmem, size = 0x20000, scoped, tag = 'input window, operand 11, single buffered']
    #allocation14 [shape = 'u8[8192]{0}', space=vmem, size = 0x2000, scoped, tag = 'output window, operand 0']
    %18 = vsyncpa [#allocation3], 0
    %s19 = scalar_lea.sflag [#allocation3], 1
    %20 = vsyncpa %s19, 0
    %21 = vsyncpa [#allocation6], 0
    %22 = vsyncpa [#allocation9], 0
    %23 = vsyncpa [#allocation12], 0
    %24 = vsyncpa [#allocation4], 0
    %s25 = scalar_lea.sflag [#allocation4], 1
    %26 = vsyncpa %s25, 0
    loop: start=0, step=1, limit=4
    $region2: #{tpu_custom_call.1} parent=1 // loop_pre_header
      _
    $region3: #{tpu_custom_call.1} parent=1 // loop_header
      %s28 = sphi 0, %s32
      %p29 = scmp.ge.s32.totalorder %s28, 4
      %s38 = sphi 0, %s40
      %s41 = sphi 0, %s38
      %s42 = sphi 0, %s41
      %s58 = sphi 0, %s42
      %s62 = sphi 0, %s62
      %s64 = sphi 0, %s62
      %s65 = sphi 0, %s64
      %s79 = sphi 0, %s65
      %s83 = sphi 0, %s83
      %s85 = sphi 0, %s83
      %s86 = sphi 0, %s85
      %s100 = sphi 0, %s86
      %s104 = sphi 0, %s104
      %s106 = sphi 0, %s104
      %s107 = sphi 0, %s106
      %s121 = sphi 0, %s107
      %s125 = sphi 0, %s125
      %s127 = sphi 0, %s125
      %s128 = sphi 0, %s127
      %s142 = sphi 0, %s128
      %s146 = sphi 0, %s146
      %s148 = sphi 0, %s146
      %s149 = sphi 0, %s148
      %s163 = sphi 0, %s149
      %s167 = sphi 0, %s167
      %s169 = sphi 0, %s167
      %s170 = sphi 0, %s169
      %s184 = sphi 0, %s170
      %s188 = sphi 0, %s188
      %s190 = sphi 0, %s188
      %s191 = sphi 0, %s190
      %s205 = sphi 0, %s191
      %s209 = sphi 0, %s209
      %s211 = sphi 0, %s209
      %s212 = sphi 0, %s211
      %s226 = sphi 0, %s212
      %s230 = sphi 0, %s230
      %s232 = sphi 0, %s230
      %s233 = sphi 0, %s232
      %s247 = sphi 0, %s233
      %s251 = sphi 0, %s251
      %s253 = sphi 0, %s251
      %s254 = sphi 0, %s253
      %s268 = sphi 0, %s254
      %s272 = sphi 0, %s272
      %s274 = sphi 0, %s272
      %s275 = sphi 0, %s274
      %s289 = sphi 0, %s275
      %s293 = sphi 0, %s293
      %s295 = sphi 0, %s293
      %s296 = sphi 0, %s295
      %s310 = sphi 0, %s296
      %s316 = sphi 0, %s318
      %s319 = sphi 0, %s316
      %s320 = sphi 0, %s319
      %s336 = sphi 0, %s320
    $region4: #{tpu_custom_call.1} parent=1 // loop_header_branch
      %31 = sbr.rel (%p29) target = $region8
    $region5: #{tpu_custom_call.1} parent=1 // loop_body
      %s33 = ssub.s32 %s28, 1
      %s34 = ssub.s32 %s28, 2
      %s35 = sadd.s32 %s28, 1
      %s36 = ssub.s32 %s28, %s35
      %p37 = scmp.eq.s32.totalorder %s36, 0
      %s39 = sadd.s32 %s38, 1
      %s40 = scalar_select %p37, %s38, %s39
      %p43 = pneg %p37
      %p44 = scmp.eq.s32.totalorder %s28, 1
      %p45 = por %p43, %p44
      %p46 = scmp.ne.s32.totalorder %s38, %s41
      %p47 = scmp.eq.s32.totalorder %s28, 0
      %p48 = por %p46, %p47
      %p49 = scmp.ne.s32.totalorder %s38, %s41
      %p50 = scmp.eq.s32.totalorder %s33, 1
      %p51 = por %p49, %p50
      %p52 = scmp.ne.s32.totalorder %s41, %s42
      %p53 = scmp.eq.s32.totalorder %s33, 0
      %p54 = por %p52, %p53
      %p55 = scmp.ne.s32.totalorder %s41, %s42
      %p56 = scmp.eq.s32.totalorder %s34, 1
      %p57 = por %p55, %p56
      %p59 = scmp.ne.s32.totalorder %s42, %s58
      %p60 = scmp.eq.s32.totalorder %s34, 0
      %p61 = por %p59, %p60
      %s63 = sadd.s32 %s62, 1
      %p66 = scmp.eq.s32.totalorder %s28, 1
      %p67 = scmp.ne.s32.totalorder %s62, %s64
      %p68 = scmp.eq.s32.totalorder %s28, 0
      %p69 = por %p67, %p68
      %p70 = scmp.ne.s32.totalorder %s62, %s64
      %p71 = scmp.eq.s32.totalorder %s33, 1
      %p72 = por %p70, %p71
      %p73 = scmp.ne.s32.totalorder %s64, %s65
      %p74 = scmp.eq.s32.totalorder %s33, 0
      %p75 = por %p73, %p74
      %p76 = scmp.ne.s32.totalorder %s64, %s65
      %p77 = scmp.eq.s32.totalorder %s34, 1
      %p78 = por %p76, %p77
      %p80 = scmp.ne.s32.totalorder %s65, %s79
      %p81 = scmp.eq.s32.totalorder %s34, 0
      %p82 = por %p80, %p81
      %s84 = sadd.s32 %s83, 1
      %p87 = scmp.eq.s32.totalorder %s28, 1
      %p88 = scmp.ne.s32.totalorder %s83, %s85
      %p89 = scmp.eq.s32.totalorder %s28, 0
      %p90 = por %p88, %p89
      %p91 = scmp.ne.s32.totalorder %s83, %s85
      %p92 = scmp.eq.s32.totalorder %s33, 1
      %p93 = por %p91, %p92
      %p94 = scmp.ne.s32.totalorder %s85, %s86
      %p95 = scmp.eq.s32.totalorder %s33, 0
      %p96 = por %p94, %p95
      %p97 = scmp.ne.s32.totalorder %s85, %s86
      %p98 = scmp.eq.s32.totalorder %s34, 1
      %p99 = por %p97, %p98
      %p101 = scmp.ne.s32.totalorder %s86, %s100
      %p102 = scmp.eq.s32.totalorder %s34, 0
      %p103 = por %p101, %p102
      %s105 = sadd.s32 %s104, 1
      %p108 = scmp.eq.s32.totalorder %s28, 1
      %p109 = scmp.ne.s32.totalorder %s104, %s106
      %p110 = scmp.eq.s32.totalorder %s28, 0
      %p111 = por %p109, %p110
      %p112 = scmp.ne.s32.totalorder %s104, %s106
      %p113 = scmp.eq.s32.totalorder %s33, 1
      %p114 = por %p112, %p113
      %p115 = scmp.ne.s32.totalorder %s106, %s107
      %p116 = scmp.eq.s32.totalorder %s33, 0
      %p117 = por %p115, %p116
      %p118 = scmp.ne.s32.totalorder %s106, %s107
      %p119 = scmp.eq.s32.totalorder %s34, 1
      %p120 = por %p118, %p119
      %p122 = scmp.ne.s32.totalorder %s107, %s121
      %p123 = scmp.eq.s32.totalorder %s34, 0
      %p124 = por %p122, %p123
      %s126 = sadd.s32 %s125, 1
      %p129 = scmp.eq.s32.totalorder %s28, 1
      %p130 = scmp.ne.s32.totalorder %s125, %s127
      %p131 = scmp.eq.s32.totalorder %s28, 0
      %p132 = por %p130, %p131
      %p133 = scmp.ne.s32.totalorder %s125, %s127
      %p134 = scmp.eq.s32.totalorder %s33, 1
      %p135 = por %p133, %p134
      %p136 = scmp.ne.s32.totalorder %s127, %s128
      %p137 = scmp.eq.s32.totalorder %s33, 0
      %p138 = por %p136, %p137
      %p139 = scmp.ne.s32.totalorder %s127, %s128
      %p140 = scmp.eq.s32.totalorder %s34, 1
      %p141 = por %p139, %p140
      %p143 = scmp.ne.s32.totalorder %s128, %s142
      %p144 = scmp.eq.s32.totalorder %s34, 0
      %p145 = por %p143, %p144
      %s147 = sadd.s32 %s146, 1
      %p150 = scmp.eq.s32.totalorder %s28, 1
      %p151 = scmp.ne.s32.totalorder %s146, %s148
      %p152 = scmp.eq.s32.totalorder %s28, 0
      %p153 = por %p151, %p152
      %p154 = scmp.ne.s32.totalorder %s146, %s148
      %p155 = scmp.eq.s32.totalorder %s33, 1
      %p156 = por %p154, %p155
      %p157 = scmp.ne.s32.totalorder %s148, %s149
      %p158 = scmp.eq.s32.totalorder %s33, 0
      %p159 = por %p157, %p158
      %p160 = scmp.ne.s32.totalorder %s148, %s149
      %p161 = scmp.eq.s32.totalorder %s34, 1
      %p162 = por %p160, %p161
      %p164 = scmp.ne.s32.totalorder %s149, %s163
      %p165 = scmp.eq.s32.totalorder %s34, 0
      %p166 = por %p164, %p165
      %s168 = sadd.s32 %s167, 1
      %p171 = scmp.eq.s32.totalorder %s28, 1
      %p172 = scmp.ne.s32.totalorder %s167, %s169
      %p173 = scmp.eq.s32.totalorder %s28, 0
      %p174 = por %p172, %p173
      %p175 = scmp.ne.s32.totalorder %s167, %s169
      %p176 = scmp.eq.s32.totalorder %s33, 1
      %p177 = por %p175, %p176
      %p178 = scmp.ne.s32.totalorder %s169, %s170
      %p179 = scmp.eq.s32.totalorder %s33, 0
      %p180 = por %p178, %p179
      %p181 = scmp.ne.s32.totalorder %s169, %s170
      %p182 = scmp.eq.s32.totalorder %s34, 1
      %p183 = por %p181, %p182
      %p185 = scmp.ne.s32.totalorder %s170, %s184
      %p186 = scmp.eq.s32.totalorder %s34, 0
      %p187 = por %p185, %p186
      %s189 = sadd.s32 %s188, 1
      %p192 = scmp.eq.s32.totalorder %s28, 1
      %p193 = scmp.ne.s32.totalorder %s188, %s190
      %p194 = scmp.eq.s32.totalorder %s28, 0
      %p195 = por %p193, %p194
      %p196 = scmp.ne.s32.totalorder %s188, %s190
      %p197 = scmp.eq.s32.totalorder %s33, 1
      %p198 = por %p196, %p197
      %p199 = scmp.ne.s32.totalorder %s190, %s191
      %p200 = scmp.eq.s32.totalorder %s33, 0
      %p201 = por %p199, %p200
      %p202 = scmp.ne.s32.totalorder %s190, %s191
      %p203 = scmp.eq.s32.totalorder %s34, 1
      %p204 = por %p202, %p203
      %p206 = scmp.ne.s32.totalorder %s191, %s205
      %p207 = scmp.eq.s32.totalorder %s34, 0
      %p208 = por %p206, %p207
      %s210 = sadd.s32 %s209, 1
      %p213 = scmp.eq.s32.totalorder %s28, 1
      %p214 = scmp.ne.s32.totalorder %s209, %s211
      %p215 = scmp.eq.s32.totalorder %s28, 0
      %p216 = por %p214, %p215
      %p217 = scmp.ne.s32.totalorder %s209, %s211
      %p218 = scmp.eq.s32.totalorder %s33, 1
      %p219 = por %p217, %p218
      %p220 = scmp.ne.s32.totalorder %s211, %s212
      %p221 = scmp.eq.s32.totalorder %s33, 0
      %p222 = por %p220, %p221
      %p223 = scmp.ne.s32.totalorder %s211, %s212
      %p224 = scmp.eq.s32.totalorder %s34, 1
      %p225 = por %p223, %p224
      %p227 = scmp.ne.s32.totalorder %s212, %s226
      %p228 = scmp.eq.s32.totalorder %s34, 0
      %p229 = por %p227, %p228
      %s231 = sadd.s32 %s230, 1
      %p234 = scmp.eq.s32.totalorder %s28, 1
      %p235 = scmp.ne.s32.totalorder %s230, %s232
      %p236 = scmp.eq.s32.totalorder %s28, 0
      %p237 = por %p235, %p236
      %p238 = scmp.ne.s32.totalorder %s230, %s232
      %p239 = scmp.eq.s32.totalorder %s33, 1
      %p240 = por %p238, %p239
      %p241 = scmp.ne.s32.totalorder %s232, %s233
      %p242 = scmp.eq.s32.totalorder %s33, 0
      %p243 = por %p241, %p242
      %p244 = scmp.ne.s32.totalorder %s232, %s233
      %p245 = scmp.eq.s32.totalorder %s34, 1
      %p246 = por %p244, %p245
      %p248 = scmp.ne.s32.totalorder %s233, %s247
      %p249 = scmp.eq.s32.totalorder %s34, 0
      %p250 = por %p248, %p249
      %s252 = sadd.s32 %s251, 1
      %p255 = scmp.eq.s32.totalorder %s28, 1
      %p256 = scmp.ne.s32.totalorder %s251, %s253
      %p257 = scmp.eq.s32.totalorder %s28, 0
      %p258 = por %p256, %p257
      %p259 = scmp.ne.s32.totalorder %s251, %s253
      %p260 = scmp.eq.s32.totalorder %s33, 1
      %p261 = por %p259, %p260
      %p262 = scmp.ne.s32.totalorder %s253, %s254
      %p263 = scmp.eq.s32.totalorder %s33, 0
      %p264 = por %p262, %p263
      %p265 = scmp.ne.s32.totalorder %s253, %s254
      %p266 = scmp.eq.s32.totalorder %s34, 1
      %p267 = por %p265, %p266
      %p269 = scmp.ne.s32.totalorder %s254, %s268
      %p270 = scmp.eq.s32.totalorder %s34, 0
      %p271 = por %p269, %p270
      %s273 = sadd.s32 %s272, 1
      %p276 = scmp.eq.s32.totalorder %s28, 1
      %p277 = scmp.ne.s32.totalorder %s272, %s274
      %p278 = scmp.eq.s32.totalorder %s28, 0
      %p279 = por %p277, %p278
      %p280 = scmp.ne.s32.totalorder %s272, %s274
      %p281 = scmp.eq.s32.totalorder %s33, 1
      %p282 = por %p280, %p281
      %p283 = scmp.ne.s32.totalorder %s274, %s275
      %p284 = scmp.eq.s32.totalorder %s33, 0
      %p285 = por %p283, %p284
      %p286 = scmp.ne.s32.totalorder %s274, %s275
      %p287 = scmp.eq.s32.totalorder %s34, 1
      %p288 = por %p286, %p287
      %p290 = scmp.ne.s32.totalorder %s275, %s289
      %p291 = scmp.eq.s32.totalorder %s34, 0
      %p292 = por %p290, %p291
      %s294 = sadd.s32 %s293, 1
      %p297 = scmp.eq.s32.totalorder %s28, 1
      %p298 = scmp.ne.s32.totalorder %s293, %s295
      %p299 = scmp.eq.s32.totalorder %s28, 0
      %p300 = por %p298, %p299
      %p301 = scmp.ne.s32.totalorder %s293, %s295
      %p302 = scmp.eq.s32.totalorder %s33, 1
      %p303 = por %p301, %p302
      %p304 = scmp.ne.s32.totalorder %s295, %s296
      %p305 = scmp.eq.s32.totalorder %s33, 0
      %p306 = por %p304, %p305
      %p307 = scmp.ne.s32.totalorder %s295, %s296
      %p308 = scmp.eq.s32.totalorder %s34, 1
      %p309 = por %p307, %p308
      %p311 = scmp.ne.s32.totalorder %s296, %s310
      %p312 = scmp.eq.s32.totalorder %s34, 0
      %p313 = por %p311, %p312
      %s314 = ssub.s32 %s28, %s35
      %p315 = scmp.eq.s32.totalorder %s314, 0
      %s317 = sadd.s32 %s316, 1
      %s318 = scalar_select %p315, %s316, %s317
      %p321 = pneg %p315
      %p322 = scmp.eq.s32.totalorder %s28, 1
      %p323 = por %p321, %p322
      %p324 = scmp.ne.s32.totalorder %s316, %s319
      %p325 = scmp.eq.s32.totalorder %s28, 0
      %p326 = por %p324, %p325
      %p327 = scmp.ne.s32.totalorder %s316, %s319
      %p328 = scmp.eq.s32.totalorder %s33, 1
      %p329 = por %p327, %p328
      %p330 = scmp.ne.s32.totalorder %s319, %s320
      %p331 = scmp.eq.s32.totalorder %s33, 0
      %p332 = por %p330, %p331
      %p333 = scmp.ne.s32.totalorder %s319, %s320
      %p334 = scmp.eq.s32.totalorder %s34, 1
      %p335 = por %p333, %p334
      %p337 = scmp.ne.s32.totalorder %s320, %s336
      %p338 = scmp.eq.s32.totalorder %s34, 0
      %p339 = por %p337, %p338
      %p340 = scmp.le.s32.totalorder 1, %s28
      %p341 = scmp.lt.s32.totalorder %s28, 3
      %p342 = pnand %p340, %p341
      %p343 = pneg %p342
      // Predicated region
      $region9: #{tpu_custom_call.1} parent=5 // pred_check
        _
      $region10: #{tpu_custom_call.1} parent=5 // pred_check_branch
        %345 = sbr.rel (%p342) target = $region12
      $region11: #{tpu_custom_call.1} parent=5 // pred_region
        %s346 = ssub.s32 %s28, 1
        // Predicated region
        $region13: #{tpu_custom_call.1} parent=11 // pred_check
          %p347 = pneg %p75
        $region14: #{tpu_custom_call.1} parent=11 // pred_check_branch
          %349 = sbr.rel (%p347) target = $region16
        $region15: #{tpu_custom_call.1} parent=11 // pred_region
          %s351 = ssub.s32 8192, 8192
          %352 = vsyncadd [#allocation6], %s351
          %s353 = sshll.u32 [#allocation5], 4
          %s354 = int_to_ptr.vmem [resolvable:$true] %s353
          %359 = dma.hbm_to_vmem [thread:$0]  %s1, 8192, %s354, [#allocation6], 256, 256, 16
        $region16: #{tpu_custom_call.1} parent=11 // pred_fallthru
          _
        // Predicated region
        $region17: #{tpu_custom_call.1} parent=11 // pred_check
          %p360 = pneg %p96
        $region18: #{tpu_custom_call.1} parent=11 // pred_check_branch
          %362 = sbr.rel (%p360) target = $region20
        $region19: #{tpu_custom_call.1} parent=11 // pred_region
          _
        $region20: #{tpu_custom_call.1} parent=11 // pred_fallthru
          _
        // Predicated region
        $region21: #{tpu_custom_call.1} parent=11 // pred_check
          %p363 = pneg %p117
        $region22: #{tpu_custom_call.1} parent=11 // pred_check_branch
          %365 = sbr.rel (%p363) target = $region24
        $region23: #{tpu_custom_call.1} parent=11 // pred_region
          %s367 = ssub.s32 4096, 4096
          %368 = vsyncadd [#allocation6], %s367
          %s369 = sshll.u32 [#allocation7], 4
          %s370 = int_to_ptr.vmem [resolvable:$true] %s369
          %375 = dma.hbm_to_vmem [thread:$0]  %s3, 4096, %s370, [#allocation6], 128, 128, 8
        $region24: #{tpu_custom_call.1} parent=11 // pred_fallthru
          _
        // Predicated region
        $region25: #{tpu_custom_call.1} parent=11 // pred_check
          %p376 = pneg %p138
        $region26: #{tpu_custom_call.1} parent=11 // pred_check_branch
          %378 = sbr.rel (%p376) target = $region28
        $region27: #{tpu_custom_call.1} parent=11 // pred_region
          _
        $region28: #{tpu_custom_call.1} parent=11 // pred_fallthru
          _
        // Predicated region
        $region29: #{tpu_custom_call.1} parent=11 // pred_check
          %p379 = pneg %p159
        $region30: #{tpu_custom_call.1} parent=11 // pred_check_branch
          %381 = sbr.rel (%p379) target = $region32
        $region31: #{tpu_custom_call.1} parent=11 // pred_region
          %s383 = ssub.s32 2048, 2048
          %384 = vsyncadd [#allocation9], %s383
          %s385 = sshll.u32 [#allocation8], 4
          %s386 = int_to_ptr.vmem [resolvable:$true] %s385
          %391 = dma.hbm_to_vmem [thread:$0]  %s5, 2048, %s386, [#allocation9], 128, 128, 8
        $region32: #{tpu_custom_call.1} parent=11 // pred_fallthru
          _
        // Predicated region
        $region33: #{tpu_custom_call.1} parent=11 // pred_check
          %p392 = pneg %p180
        $region34: #{tpu_custom_call.1} parent=11 // pred_check_branch
          %394 = sbr.rel (%p392) target = $region36
        $region35: #{tpu_custom_call.1} parent=11 // pred_region
          _
        $region36: #{tpu_custom_call.1} parent=11 // pred_fallthru
          _
        // Predicated region
        $region37: #{tpu_custom_call.1} parent=11 // pred_check
          %p395 = pneg %p201
        $region38: #{tpu_custom_call.1} parent=11 // pred_check_branch
          %397 = sbr.rel (%p395) target = $region40
        $region39: #{tpu_custom_call.1} parent=11 // pred_region
          %s399 = ssub.s32 4096, 4096
          %400 = vsyncadd [#allocation9], %s399
          %s401 = sshll.u32 [#allocation10], 4
          %s402 = int_to_ptr.vmem [resolvable:$true] %s401
          %407 = dma.hbm_to_vmem [thread:$0]  %s7, 4096, %s402, [#allocation9], 256, 256, 16
        $region40: #{tpu_custom_call.1} parent=11 // pred_fallthru
          _
        // Predicated region
        $region41: #{tpu_custom_call.1} parent=11 // pred_check
          %p408 = pneg %p222
        $region42: #{tpu_custom_call.1} parent=11 // pred_check_branch
          %410 = sbr.rel (%p408) target = $region44
        $region43: #{tpu_custom_call.1} parent=11 // pred_region
          _
        $region44: #{tpu_custom_call.1} parent=11 // pred_fallthru
          _
        // Predicated region
        $region45: #{tpu_custom_call.1} parent=11 // pred_check
          %p411 = pneg %p243
        $region46: #{tpu_custom_call.1} parent=11 // pred_check_branch
          %413 = sbr.rel (%p411) target = $region48
        $region47: #{tpu_custom_call.1} parent=11 // pred_region
          %s415 = ssub.s32 8192, 8192
          %416 = vsyncadd [#allocation12], %s415
          %s417 = sshll.u32 [#allocation11], 4
          %s418 = int_to_ptr.vmem [resolvable:$true] %s417
          %423 = dma.hbm_to_vmem [thread:$0]  %s9, 8192, %s418, [#allocation12], 256, 256, 16
        $region48: #{tpu_custom_call.1} parent=11 // pred_fallthru
          _
        // Predicated region
        $region49: #{tpu_custom_call.1} parent=11 // pred_check
          %p424 = pneg %p264
        $region50: #{tpu_custom_call.1} parent=11 // pred_check_branch
          %426 = sbr.rel (%p424) target = $region52
        $region51: #{tpu_custom_call.1} parent=11 // pred_region
          _
        $region52: #{tpu_custom_call.1} parent=11 // pred_fallthru
          _
        // Predicated region
        $region53: #{tpu_custom_call.1} parent=11 // pred_check
          %p427 = pneg %p285
        $region54: #{tpu_custom_call.1} parent=11 // pred_check_branch
          %429 = sbr.rel (%p427) target = $region56
        $region55: #{tpu_custom_call.1} parent=11 // pred_region
          %s431 = ssub.s32 4096, 4096
          %432 = vsyncadd [#allocation12], %s431
          %s433 = sshll.u32 [#allocation13], 4
          %s434 = int_to_ptr.vmem [resolvable:$true] %s433
          %439 = dma.hbm_to_vmem [thread:$0]  %s11, 4096, %s434, [#allocation12], 128, 128, 8
        $region56: #{tpu_custom_call.1} parent=11 // pred_fallthru
          _
        // Predicated region
        $region57: #{tpu_custom_call.1} parent=11 // pred_check
          %p440 = pneg %p306
        $region58: #{tpu_custom_call.1} parent=11 // pred_check_branch
          %442 = sbr.rel (%p440) target = $region60
        $region59: #{tpu_custom_call.1} parent=11 // pred_region
          _
        $region60: #{tpu_custom_call.1} parent=11 // pred_fallthru
          _
      $region12: #{tpu_custom_call.1} parent=5 // pred_fallthru
        _
      %p443 = scmp.lt.s32.totalorder %s28, 2
      // Predicated region
      $region61: #{tpu_custom_call.1} parent=5 // pred_check
        %p444 = pneg %p443
      $region62: #{tpu_custom_call.1} parent=5 // pred_check_branch
        %446 = sbr.rel (%p444) target = $region64
      $region63: #{tpu_custom_call.1} parent=5 // pred_region
        // Predicated region
        $region65: #{tpu_custom_call.1} parent=63 // pred_check
          %p447 = pneg %p48
        $region66: #{tpu_custom_call.1} parent=63 // pred_check_branch
          %449 = sbr.rel (%p447) target = $region68
        $region67: #{tpu_custom_call.1} parent=63 // pred_region
          %s450 = sand.u32 %s38, 1
          %s451 = scalar_lea.sflag [#allocation3], %s450
          %s452 = sand.u32 %s38, 1
          %s453 = smul.addr %s452, 16
          %s454 = scalar_lea.vmem [#allocation2], %s453
          %s456 = ssub.s32 256, 256
          %457 = vsyncadd %s451, %s456
          %s458 = smul.addr %s28, 2
          %s459 = smul.addr %s458, 128
          %s460 = scalar_lea.hbm %s0, %s459
          %s462 = sshll.u32 %s454, 4
          %s463 = int_to_ptr.vmem [resolvable:$true] %s462
          %465 = dma.hbm_to_vmem [thread:$0]  %s460, 256, %s463, %s451
        $region68: #{tpu_custom_call.1} parent=63 // pred_fallthru
          _
      $region64: #{tpu_custom_call.1} parent=5 // pred_fallthru
        _
      %p466 = scmp.le.s32.totalorder 1, %s28
      %p467 = scmp.lt.s32.totalorder %s28, 3
      %p468 = pnand %p466, %p467
      %p469 = pneg %p468
      // Predicated region
      $region69: #{tpu_custom_call.1} parent=5 // pred_check
        _
      $region70: #{tpu_custom_call.1} parent=5 // pred_check_branch
        %471 = sbr.rel (%p468) target = $region72
      $region71: #{tpu_custom_call.1} parent=5 // pred_region
        %s472 = ssub.s32 %s28, 1
        %s473 = sand.u32 %s41, 1
        %s474 = scalar_lea.sflag [#allocation3], %s473
        %s475 = sand.u32 %s41, 1
        %s476 = smul.addr %s475, 16
        %s477 = scalar_lea.vmem [#allocation2], %s476
        // Predicated region
        $region73: #{tpu_custom_call.1} parent=71 // pred_check
          %p478 = pneg %p54
        $region74: #{tpu_custom_call.1} parent=71 // pred_check_branch
          %480 = sbr.rel (%p478) target = $region76
        $region75: #{tpu_custom_call.1} parent=71 // pred_region
          %481 = dma.done %s474, 256
        $region76: #{tpu_custom_call.1} parent=71 // pred_fallthru
          _
        // Predicated region
        $region77: #{tpu_custom_call.1} parent=71 // pred_check
          %p482 = pneg %p75
        $region78: #{tpu_custom_call.1} parent=71 // pred_check_branch
          %484 = sbr.rel (%p482) target = $region80
        $region79: #{tpu_custom_call.1} parent=71 // pred_region
          %485 = dma.done [#allocation6], 8192
        $region80: #{tpu_custom_call.1} parent=71 // pred_fallthru
          _
        // Predicated region
        $region81: #{tpu_custom_call.1} parent=71 // pred_check
          %p486 = pneg %p117
        $region82: #{tpu_custom_call.1} parent=71 // pred_check_branch
          %488 = sbr.rel (%p486) target = $region84
        $region83: #{tpu_custom_call.1} parent=71 // pred_region
          %489 = dma.done [#allocation6], 4096
        $region84: #{tpu_custom_call.1} parent=71 // pred_fallthru
          _
        // Predicated region
        $region85: #{tpu_custom_call.1} parent=71 // pred_check
          %p490 = pneg %p159
        $region86: #{tpu_custom_call.1} parent=71 // pred_check_branch
          %492 = sbr.rel (%p490) target = $region88
        $region87: #{tpu_custom_call.1} parent=71 // pred_region
          %493 = dma.done [#allocation9], 2048
        $region88: #{tpu_custom_call.1} parent=71 // pred_fallthru
          _
        // Predicated region
        $region89: #{tpu_custom_call.1} parent=71 // pred_check
          %p494 = pneg %p201
        $region90: #{tpu_custom_call.1} parent=71 // pred_check_branch
          %496 = sbr.rel (%p494) target = $region92
        $region91: #{tpu_custom_call.1} parent=71 // pred_region
          %497 = dma.done [#allocation9], 4096
        $region92: #{tpu_custom_call.1} parent=71 // pred_fallthru
          _
        // Predicated region
        $region93: #{tpu_custom_call.1} parent=71 // pred_check
          %p498 = pneg %p243
        $region94: #{tpu_custom_call.1} parent=71 // pred_check_branch
          %500 = sbr.rel (%p498) target = $region96
        $region95: #{tpu_custom_call.1} parent=71 // pred_region
          %501 = dma.done [#allocation12], 8192
        $region96: #{tpu_custom_call.1} parent=71 // pred_fallthru
          _
        // Predicated region
        $region97: #{tpu_custom_call.1} parent=71 // pred_check
          %p502 = pneg %p285
        $region98: #{tpu_custom_call.1} parent=71 // pred_check_branch
          %504 = sbr.rel (%p502) target = $region100
        $region99: #{tpu_custom_call.1} parent=71 // pred_region
          %505 = dma.done [#allocation12], 4096
        $region100: #{tpu_custom_call.1} parent=71 // pred_fallthru
          _
        %s506 = sand.u32 %s41, 1
        %s507 = scalar_lea.sflag [#allocation3], %s506
        %s508 = sand.u32 %s41, 1
        %s509 = smul.addr %s508, 16
        %s510 = scalar_lea.vmem [#allocation2], %s509
        %p511 = pneg %p54
        %p512 = pneg %p51
        %p513 = pneg %p75
        %p514 = pneg %p72
        %p515 = pneg %p96
        %p516 = pneg %p93
        %p517 = pneg %p117
        %p518 = pneg %p114
        %p519 = pneg %p138
        %p520 = pneg %p135
        %p521 = pneg %p159
        %p522 = pneg %p156
        %p523 = pneg %p180
        %p524 = pneg %p177
        %p525 = pneg %p201
        %p526 = pneg %p198
        %p527 = pneg %p222
        %p528 = pneg %p219
        %p529 = pneg %p243
        %p530 = pneg %p240
        %p531 = pneg %p264
        %p532 = pneg %p261
        %p533 = pneg %p285
        %p534 = pneg %p282
        %p535 = pneg %p306
        %p536 = pneg %p303
        %p537 = pneg %p332
        %p538 = pneg %p329
        %s539 = sand.u32 %s319, 1
        %s540 = scalar_lea.sflag [#allocation4], %s539
        %s541 = sand.u32 %s319, 1
        %s542 = smul.addr %s541, 8
        %s543 = scalar_lea.vmem [#allocation14], %s542
        %v544 = vld [vmem:[%s477] sm:$0xff]
        %v545 = vld [vmem:[%s477 + $0x8] sm:$0xff]
        %v546 = vld [vmem:[#allocation5] sm:$0xff]
        %v547 = vld [vmem:[#allocation5 + $0x8] sm:$0xff]
        %v548 = vld [vmem:[#allocation5 + $0x10] sm:$0xff]
        %v549 = vld [vmem:[#allocation5 + $0x18] sm:$0xff]
        %v550 = vld [vmem:[#allocation5 + $0x20] sm:$0xff]
        %v551 = vld [vmem:[#allocation5 + $0x28] sm:$0xff]
        %v552 = vld [vmem:[#allocation5 + $0x30] sm:$0xff]
        %v553 = vld [vmem:[#allocation5 + $0x38] sm:$0xff]
        %v554 = vld [vmem:[#allocation5 + $0x40] sm:$0xff]
        %v555 = vld [vmem:[#allocation5 + $0x48] sm:$0xff]
        %v556 = vld [vmem:[#allocation5 + $0x50] sm:$0xff]
        %v557 = vld [vmem:[#allocation5 + $0x58] sm:$0xff]
        %v558 = vld [vmem:[#allocation5 + $0x60] sm:$0xff]
        %v559 = vld [vmem:[#allocation5 + $0x68] sm:$0xff]
        %v560 = vld [vmem:[#allocation5 + $0x70] sm:$0xff]
        %v561 = vld [vmem:[#allocation5 + $0x78] sm:$0xff]
        %v562 = vld [vmem:[#allocation5 + $0x80] sm:$0xff]
        %v563 = vld [vmem:[#allocation5 + $0x88] sm:$0xff]
        %v564 = vld [vmem:[#allocation5 + $0x90] sm:$0xff]
        %v565 = vld [vmem:[#allocation5 + $0x98] sm:$0xff]
        %v566 = vld [vmem:[#allocation5 + $0xa0] sm:$0xff]
        %v567 = vld [vmem:[#allocation5 + $0xa8] sm:$0xff]
        %v568 = vld [vmem:[#allocation5 + $0xb0] sm:$0xff]
        %v569 = vld [vmem:[#allocation5 + $0xb8] sm:$0xff]
        %v570 = vld [vmem:[#allocation5 + $0xc0] sm:$0xff]
        %v571 = vld [vmem:[#allocation5 + $0xc8] sm:$0xff]
        %v572 = vld [vmem:[#allocation5 + $0xd0] sm:$0xff]
        %v573 = vld [vmem:[#allocation5 + $0xd8] sm:$0xff]
        %v574 = vld [vmem:[#allocation5 + $0xe0] sm:$0xff]
        %v575 = vld [vmem:[#allocation5 + $0xe8] sm:$0xff]
        %v576 = vld [vmem:[#allocation5 + $0xf0] sm:$0xff]
        %v577 = vld [vmem:[#allocation5 + $0xf8] sm:$0xff]
        %v578 = vld [vmem:[#allocation5 + $0x100] sm:$0xff]
        %v579 = vld [vmem:[#allocation5 + $0x108] sm:$0xff]
        %v580 = vld [vmem:[#allocation5 + $0x110] sm:$0xff]
        %v581 = vld [vmem:[#allocation5 + $0x118] sm:$0xff]
        %v582 = vld [vmem:[#allocation5 + $0x120] sm:$0xff]
        %v583 = vld [vmem:[#allocation5 + $0x128] sm:$0xff]
        %v584 = vld [vmem:[#allocation5 + $0x130] sm:$0xff]
        %v585 = vld [vmem:[#allocation5 + $0x138] sm:$0xff]
        %v586 = vld [vmem:[#allocation5 + $0x140] sm:$0xff]
        %v587 = vld [vmem:[#allocation5 + $0x148] sm:$0xff]
        %v588 = vld [vmem:[#allocation5 + $0x150] sm:$0xff]
        %v589 = vld [vmem:[#allocation5 + $0x158] sm:$0xff]
        %v590 = vld [vmem:[#allocation5 + $0x160] sm:$0xff]
        %v591 = vld [vmem:[#allocation5 + $0x168] sm:$0xff]
        %v592 = vld [vmem:[#allocation5 + $0x170] sm:$0xff]
        %v593 = vld [vmem:[#allocation5 + $0x178] sm:$0xff]
        %v594 = vld [vmem:[#allocation5 + $0x180] sm:$0xff]
        %v595 = vld [vmem:[#allocation5 + $0x188] sm:$0xff]
        %v596 = vld [vmem:[#allocation5 + $0x190] sm:$0xff]
        %v597 = vld [vmem:[#allocation5 + $0x198] sm:$0xff]
        %v598 = vld [vmem:[#allocation5 + $0x1a0] sm:$0xff]
        %v599 = vld [vmem:[#allocation5 + $0x1a8] sm:$0xff]
        %v600 = vld [vmem:[#allocation5 + $0x1b0] sm:$0xff]
        %v601 = vld [vmem:[#allocation5 + $0x1b8] sm:$0xff]
        %v602 = vld [vmem:[#allocation5 + $0x1c0] sm:$0xff]
        %v603 = vld [vmem:[#allocation5 + $0x1c8] sm:$0xff]
        %v604 = vld [vmem:[#allocation5 + $0x1d0] sm:$0xff]
        %v605 = vld [vmem:[#allocation5 + $0x1d8] sm:$0xff]
        %v606 = vld [vmem:[#allocation5 + $0x1e0] sm:$0xff]
        %v607 = vld [vmem:[#allocation5 + $0x1e8] sm:$0xff]
        %v608 = vld [vmem:[#allocation5 + $0x1f0] sm:$0xff]
        %v609 = vld [vmem:[#allocation5 + $0x1f8] sm:$0xff]
        %v610 = vld [vmem:[%s2] sm:$0x3]
        %v612 = vlaneseq
        %v613 = vshrl.u32 %v612, 7
        %v614 = vsub.s32 0, %v613
        %v615 = vrot.slane %v610, %v614
        %v616 = vlaneseq
        %v617 = vshrl.u32 %v616, 7
        %v618 = vsub.s32 1, %v617
        %v619 = vrot.slane %v610, %v618
        %622 = vmatprep.subr.mxu0 %v547
        %623 = vmatpush1.msra.mxu0 %v546
        %624 = vmatprep.subr.mxu0 %v549
        %625 = vmatpush1.msra.mxu0 %v548
        %626 = vmatprep.subr.mxu0 %v551
        %627 = vmatpush1.msra.mxu0 %v550
        %628 = vmatprep.subr.mxu0 %v553
        %629 = vmatpush1.msra.mxu0 %v552
        %630 = vmatprep.subr.mxu0 %v555
        %631 = vmatpush1.msra.mxu0 %v554
        %632 = vmatprep.subr.mxu0 %v557
        %633 = vmatpush1.msra.mxu0 %v556
        %634 = vmatprep.subr.mxu0 %v559
        %635 = vmatpush1.msra.mxu0 %v558
        %636 = vmatprep.subr.mxu0 %v561
        %637 = vmatpush1.msra.mxu0 %v560
        %638 = vmatprep.subr.mxu0 %v563
        %639 = vmatpush1.msra.mxu0 %v562
        %640 = vmatprep.subr.mxu0 %v565
        %641 = vmatpush1.msra.mxu0 %v564
        %642 = vmatprep.subr.mxu0 %v567
        %643 = vmatpush1.msra.mxu0 %v566
        %644 = vmatprep.subr.mxu0 %v569
        %645 = vmatpush1.msra.mxu0 %v568
        %646 = vmatprep.subr.mxu0 %v571
        %647 = vmatpush1.msra.mxu0 %v570
        %648 = vmatprep.subr.mxu0 %v573
        %649 = vmatpush1.msra.mxu0 %v572
        %650 = vmatprep.subr.mxu0 %v575
        %651 = vmatpush1.msra.mxu0 %v574
        %652 = vmatprep.subr.mxu0 %v577
        %653 = vmatpush1.msra.mxu0 %v576
        %654 = vmatprep.subr.mxu0 %v579
        %655 = vmatpush1.msra.mxu0 %v578
        %656 = vmatprep.subr.mxu0 %v581
        %657 = vmatpush1.msra.mxu0 %v580
        %658 = vmatprep.subr.mxu0 %v583
        %659 = vmatpush1.msra.mxu0 %v582
        %660 = vmatprep.subr.mxu0 %v585
        %661 = vmatpush1.msra.mxu0 %v584
        %662 = vmatprep.subr.mxu0 %v587
        %663 = vmatpush1.msra.mxu0 %v586
        %664 = vmatprep.subr.mxu0 %v589
        %665 = vmatpush1.msra.mxu0 %v588
        %666 = vmatprep.subr.mxu0 %v591
        %667 = vmatpush1.msra.mxu0 %v590
        %668 = vmatprep.subr.mxu0 %v593
        %669 = vmatpush1.msra.mxu0 %v592
        %670 = vmatprep.subr.mxu0 %v595
        %671 = vmatpush1.msra.mxu0 %v594
        %672 = vmatprep.subr.mxu0 %v597
        %673 = vmatpush1.msra.mxu0 %v596
        %674 = vmatprep.subr.mxu0 %v599
        %675 = vmatpush1.msra.mxu0 %v598
        %676 = vmatprep.subr.mxu0 %v601
        %677 = vmatpush1.msra.mxu0 %v600
        %678 = vmatprep.subr.mxu0 %v603
        %679 = vmatpush1.msra.mxu0 %v602
        %680 = vmatprep.subr.mxu0 %v605
        %681 = vmatpush1.msra.mxu0 %v604
        %682 = vmatprep.subr.mxu0 %v607
        %683 = vmatpush1.msra.mxu0 %v606
        %684 = vmatprep.subr.mxu0 %v609
        %685 = vmatpush1.msra.mxu0 %v608
        %686 = vmatprep.mubr.f32.mxu0 %v545
        %687 = vmatmul.mubr.f32.gmra.mrb[0].mxu0 %v544
        %v688 = vpop.f32.mrb[0].mxu0
        %v689 = vadd.f32 %v615, %v688
        %v690 = vpop.f32.mrb[0].mxu0
        %v691 = vadd.f32 %v619, %v690
        %692 = vdwg.mxu0
        %v693 = vmax.f32 %v689, 0.0
        %v694 = vmax.f32 %v691, 0.0
        %v695 = vld [vmem:[#allocation7] sm:$0xff]
        %v696 = vld [vmem:[#allocation7 + $0x8] sm:$0xff]
        %v697 = vld [vmem:[#allocation7 + $0x10] sm:$0xff]
        %v698 = vld [vmem:[#allocation7 + $0x18] sm:$0xff]
        %v699 = vld [vmem:[#allocation7 + $0x20] sm:$0xff]
        %v700 = vld [vmem:[#allocation7 + $0x28] sm:$0xff]
        %v701 = vld [vmem:[#allocation7 + $0x30] sm:$0xff]
        %v702 = vld [vmem:[#allocation7 + $0x38] sm:$0xff]
        %v703 = vld [vmem:[#allocation7 + $0x40] sm:$0xff]
        %v704 = vld [vmem:[#allocation7 + $0x48] sm:$0xff]
        %v705 = vld [vmem:[#allocation7 + $0x50] sm:$0xff]
        %v706 = vld [vmem:[#allocation7 + $0x58] sm:$0xff]
        %v707 = vld [vmem:[#allocation7 + $0x60] sm:$0xff]
        %v708 = vld [vmem:[#allocation7 + $0x68] sm:$0xff]
        %v709 = vld [vmem:[#allocation7 + $0x70] sm:$0xff]
        %v710 = vld [vmem:[#allocation7 + $0x78] sm:$0xff]
        %v711 = vld [vmem:[#allocation7 + $0x80] sm:$0xff]
        %v712 = vld [vmem:[#allocation7 + $0x88] sm:$0xff]
        %v713 = vld [vmem:[#allocation7 + $0x90] sm:$0xff]
        %v714 = vld [vmem:[#allocation7 + $0x98] sm:$0xff]
        %v715 = vld [vmem:[#allocation7 + $0xa0] sm:$0xff]
        %v716 = vld [vmem:[#allocation7 + $0xa8] sm:$0xff]
        %v717 = vld [vmem:[#allocation7 + $0xb0] sm:$0xff]
        %v718 = vld [vmem:[#allocation7 + $0xb8] sm:$0xff]
        %v719 = vld [vmem:[#allocation7 + $0xc0] sm:$0xff]
        %v720 = vld [vmem:[#allocation7 + $0xc8] sm:$0xff]
        %v721 = vld [vmem:[#allocation7 + $0xd0] sm:$0xff]
        %v722 = vld [vmem:[#allocation7 + $0xd8] sm:$0xff]
        %v723 = vld [vmem:[#allocation7 + $0xe0] sm:$0xff]
        %v724 = vld [vmem:[#allocation7 + $0xe8] sm:$0xff]
        %v725 = vld [vmem:[#allocation7 + $0xf0] sm:$0xff]
        %v726 = vld [vmem:[#allocation7 + $0xf8] sm:$0xff]
        %v727 = vld [vmem:[%s4] sm:$0x1]
        %v729 = vlaneseq
        %v730 = vshrl.u32 %v729, 7
        %v731 = vsub.s32 0, %v730
        %v732 = vrot.slane %v727, %v731
        %734 = vmatprep.subr.mxu0 0.0
        %735 = vmatpush1.msra.mxu0 %v695
        %736 = vmatprep.subr.mxu0 0.0
        %737 = vmatpush1.msra.mxu0 %v696
        %738 = vmatprep.subr.mxu0 0.0
        %739 = vmatpush1.msra.mxu0 %v697
        %740 = vmatprep.subr.mxu0 0.0
        %741 = vmatpush1.msra.mxu0 %v698
        %742 = vmatprep.subr.mxu0 0.0
        %743 = vmatpush1.msra.mxu0 %v699
        %744 = vmatprep.subr.mxu0 0.0
        %745 = vmatpush1.msra.mxu0 %v700
        %746 = vmatprep.subr.mxu0 0.0
        %747 = vmatpush1.msra.mxu0 %v701
        %748 = vmatprep.subr.mxu0 0.0
        %749 = vmatpush1.msra.mxu0 %v702
        %750 = vmatprep.subr.mxu0 0.0
        %751 = vmatpush1.msra.mxu0 %v703
        %752 = vmatprep.subr.mxu0 0.0
        %753 = vmatpush1.msra.mxu0 %v704
        %754 = vmatprep.subr.mxu0 0.0
        %755 = vmatpush1.msra.mxu0 %v705
        %756 = vmatprep.subr.mxu0 0.0
        %757 = vmatpush1.msra.mxu0 %v706
        %758 = vmatprep.subr.mxu0 0.0
        %759 = vmatpush1.msra.mxu0 %v707
        %760 = vmatprep.subr.mxu0 0.0
        %761 = vmatpush1.msra.mxu0 %v708
        %762 = vmatprep.subr.mxu0 0.0
        %763 = vmatpush1.msra.mxu0 %v709
        %764 = vmatprep.subr.mxu0 0.0
        %765 = vmatpush1.msra.mxu0 %v710
        %766 = vmatprep.subr.mxu0 0.0
        %767 = vmatpush1.msra.mxu0 %v711
        %768 = vmatprep.subr.mxu0 0.0
        %769 = vmatpush1.msra.mxu0 %v712
        %770 = vmatprep.subr.mxu0 0.0
        %771 = vmatpush1.msra.mxu0 %v713
        %772 = vmatprep.subr.mxu0 0.0
        %773 = vmatpush1.msra.mxu0 %v714
        %774 = vmatprep.subr.mxu0 0.0
        %775 = vmatpush1.msra.mxu0 %v715
        %776 = vmatprep.subr.mxu0 0.0
        %777 = vmatpush1.msra.mxu0 %v716
        %778 = vmatprep.subr.mxu0 0.0
        %779 = vmatpush1.msra.mxu0 %v717
        %780 = vmatprep.subr.mxu0 0.0
        %781 = vmatpush1.msra.mxu0 %v718
        %782 = vmatprep.subr.mxu0 0.0
        %783 = vmatpush1.msra.mxu0 %v719
        %784 = vmatprep.subr.mxu0 0.0
        %785 = vmatpush1.msra.mxu0 %v720
        %786 = vmatprep.subr.mxu0 0.0
        %787 = vmatpush1.msra.mxu0 %v721
        %788 = vmatprep.subr.mxu0 0.0
        %789 = vmatpush1.msra.mxu0 %v722
        %790 = vmatprep.subr.mxu0 0.0
        %791 = vmatpush1.msra.mxu0 %v723
        %792 = vmatprep.subr.mxu0 0.0
        %793 = vmatpush1.msra.mxu0 %v724
        %794 = vmatprep.subr.mxu0 0.0
        %795 = vmatpush1.msra.mxu0 %v725
        %796 = vmatprep.subr.mxu0 0.0
        %797 = vmatpush1.msra.mxu0 %v726
        %798 = vmatprep.mubr.f32.mxu0 %v694
        %799 = vmatmul.mubr.f32.gmra.mrb[0].mxu0 %v693
        %v800 = vpop.f32.mrb[0].mxu0
        %v801 = vadd.f32 %v732, %v800
        %v802 = vpop.f32.mrb[0].mxu0
        %803 = vdwg.mxu0
        %v804 = vmax.f32 %v801, 0.0
        %v805 = vld [vmem:[#allocation8] sm:$0xff]
        %v806 = vld [vmem:[#allocation8 + $0x8] sm:$0xff]
        %v807 = vld [vmem:[#allocation8 + $0x10] sm:$0xff]
        %v808 = vld [vmem:[#allocation8 + $0x18] sm:$0xff]
        %v809 = vld [vmem:[#allocation8 + $0x20] sm:$0xff]
        %v810 = vld [vmem:[#allocation8 + $0x28] sm:$0xff]
        %v811 = vld [vmem:[#allocation8 + $0x30] sm:$0xff]
        %v812 = vld [vmem:[#allocation8 + $0x38] sm:$0xff]
        %v813 = vld [vmem:[#allocation8 + $0x40] sm:$0xff]
        %v814 = vld [vmem:[#allocation8 + $0x48] sm:$0xff]
        %v815 = vld [vmem:[#allocation8 + $0x50] sm:$0xff]
        %v816 = vld [vmem:[#allocation8 + $0x58] sm:$0xff]
        %v817 = vld [vmem:[#allocation8 + $0x60] sm:$0xff]
        %v818 = vld [vmem:[#allocation8 + $0x68] sm:$0xff]
        %v819 = vld [vmem:[#allocation8 + $0x70] sm:$0xff]
        %v820 = vld [vmem:[#allocation8 + $0x78] sm:$0xff]
        %v821 = vld [vmem:[%s6] sm:$0x1]
        %v823 = vlaneseq
        %v824 = vshrl.u32 %v823, 7
        %v825 = vsub.s32 0, %v824
        %v826 = vrot.slane %v821, %v825
        %828 = vmatprep.subr.mxu0 0.0
        %829 = vmatpush1.msra.mxu0 %v805
        %830 = vmatprep.subr.mxu0 0.0
        %831 = vmatpush1.msra.mxu0 %v806
        %832 = vmatprep.subr.mxu0 0.0
        %833 = vmatpush1.msra.mxu0 %v807
        %834 = vmatprep.subr.mxu0 0.0
        %835 = vmatpush1.msra.mxu0 %v808
        %836 = vmatprep.subr.mxu0 0.0
        %837 = vmatpush1.msra.mxu0 %v809
        %838 = vmatprep.subr.mxu0 0.0
        %839 = vmatpush1.msra.mxu0 %v810
        %840 = vmatprep.subr.mxu0 0.0
        %841 = vmatpush1.msra.mxu0 %v811
        %842 = vmatprep.subr.mxu0 0.0
        %843 = vmatpush1.msra.mxu0 %v812
        %844 = vmatprep.subr.mxu0 0.0
        %845 = vmatpush1.msra.mxu0 %v813
        %846 = vmatprep.subr.mxu0 0.0
        %847 = vmatpush1.msra.mxu0 %v814
        %848 = vmatprep.subr.mxu0 0.0
        %849 = vmatpush1.msra.mxu0 %v815
        %850 = vmatprep.subr.mxu0 0.0
        %851 = vmatpush1.msra.mxu0 %v816
        %852 = vmatprep.subr.mxu0 0.0
        %853 = vmatpush1.msra.mxu0 %v817
        %854 = vmatprep.subr.mxu0 0.0
        %855 = vmatpush1.msra.mxu0 %v818
        %856 = vmatprep.subr.mxu0 0.0
        %857 = vmatpush1.msra.mxu0 %v819
        %858 = vmatprep.subr.mxu0 0.0
        %859 = vmatpush1.msra.mxu0 %v820
        %860 = vmatprep.subr.mxu0 0.0
        %861 = vmatpush1.msra.mxu0 0.0
        %862 = vmatprep.subr.mxu0 0.0
        %863 = vmatpush1.msra.mxu0 0.0
        %864 = vmatprep.subr.mxu0 0.0
        %865 = vmatpush1.msra.mxu0 0.0
        %866 = vmatprep.subr.mxu0 0.0
        %867 = vmatpush1.msra.mxu0 0.0
        %868 = vmatprep.subr.mxu0 0.0
        %869 = vmatpush1.msra.mxu0 0.0
        %870 = vmatprep.subr.mxu0 0.0
        %871 = vmatpush1.msra.mxu0 0.0
        %872 = vmatprep.subr.mxu0 0.0
        %873 = vmatpush1.msra.mxu0 0.0
        %874 = vmatprep.subr.mxu0 0.0
        %875 = vmatpush1.msra.mxu0 0.0
        %876 = vmatprep.subr.mxu0 0.0
        %877 = vmatpush1.msra.mxu0 0.0
        %878 = vmatprep.subr.mxu0 0.0
        %879 = vmatpush1.msra.mxu0 0.0
        %880 = vmatprep.subr.mxu0 0.0
        %881 = vmatpush1.msra.mxu0 0.0
        %882 = vmatprep.subr.mxu0 0.0
        %883 = vmatpush1.msra.mxu0 0.0
        %884 = vmatprep.subr.mxu0 0.0
        %885 = vmatpush1.msra.mxu0 0.0
        %886 = vmatprep.subr.mxu0 0.0
        %887 = vmatpush1.msra.mxu0 0.0
        %888 = vmatprep.subr.mxu0 0.0
        %889 = vmatpush1.msra.mxu0 0.0
        %890 = vmatprep.subr.mxu0 0.0
        %891 = vmatpush1.msra.mxu0 0.0
        %892 = vmatprep.mubr.f32.mxu0 0.0
        %893 = vmatmul.mubr.f32.gmra.mrb[0].mxu0 %v804
        %v894 = vpop.f32.mrb[0].mxu0
        %v895 = vadd.f32 %v826, %v894
        %v896 = vpop.f32.mrb[0].mxu0
        %897 = vdwg.mxu0
        %v898 = vmax.f32 %v895, 0.0
        %v899 = vld [vmem:[#allocation10] sm:$0xff]
        %v900 = vld [vmem:[#allocation10 + $0x8] sm:$0xff]
        %v901 = vld [vmem:[#allocation10 + $0x10] sm:$0xff]
        %v902 = vld [vmem:[#allocation10 + $0x18] sm:$0xff]
        %v903 = vld [vmem:[#allocation10 + $0x20] sm:$0xff]
        %v904 = vld [vmem:[#allocation10 + $0x28] sm:$0xff]
        %v905 = vld [vmem:[#allocation10 + $0x30] sm:$0xff]
        %v906 = vld [vmem:[#allocation10 + $0x38] sm:$0xff]
        %v907 = vld [vmem:[#allocation10 + $0x40] sm:$0xff]
        %v908 = vld [vmem:[#allocation10 + $0x48] sm:$0xff]
        %v909 = vld [vmem:[#allocation10 + $0x50] sm:$0xff]
        %v910 = vld [vmem:[#allocation10 + $0x58] sm:$0xff]
        %v911 = vld [vmem:[#allocation10 + $0x60] sm:$0xff]
        %v912 = vld [vmem:[#allocation10 + $0x68] sm:$0xff]
        %v913 = vld [vmem:[#allocation10 + $0x70] sm:$0xff]
        %v914 = vld [vmem:[#allocation10 + $0x78] sm:$0xff]
        %v915 = vld [vmem:[#allocation10 + $0x80] sm:$0xff]
        %v916 = vld [vmem:[#allocation10 + $0x88] sm:$0xff]
        %v917 = vld [vmem:[#allocation10 + $0x90] sm:$0xff]
        %v918 = vld [vmem:[#allocation10 + $0x98] sm:$0xff]
        %v919 = vld [vmem:[#allocation10 + $0xa0] sm:$0xff]
        %v920 = vld [vmem:[#allocation10 + $0xa8] sm:$0xff]
        %v921 = vld [vmem:[#allocation10 + $0xb0] sm:$0xff]
        %v922 = vld [vmem:[#allocation10 + $0xb8] sm:$0xff]
        %v923 = vld [vmem:[#allocation10 + $0xc0] sm:$0xff]
        %v924 = vld [vmem:[#allocation10 + $0xc8] sm:$0xff]
        %v925 = vld [vmem:[#allocation10 + $0xd0] sm:$0xff]
        %v926 = vld [vmem:[#allocation10 + $0xd8] sm:$0xff]
        %v927 = vld [vmem:[#allocation10 + $0xe0] sm:$0xff]
        %v928 = vld [vmem:[#allocation10 + $0xe8] sm:$0xff]
        %v929 = vld [vmem:[#allocation10 + $0xf0] sm:$0xff]
        %v930 = vld [vmem:[#allocation10 + $0xf8] sm:$0xff]
        %v931 = vld [vmem:[%s8] sm:$0x3]
        %v933 = vlaneseq
        %v934 = vshrl.u32 %v933, 7
        %v935 = vsub.s32 0, %v934
        %v936 = vrot.slane %v931, %v935
        %v937 = vlaneseq
        %v938 = vshrl.u32 %v937, 7
        %v939 = vsub.s32 1, %v938
        %v940 = vrot.slane %v931, %v939
        %943 = vmatprep.subr.mxu0 %v900
        %944 = vmatpush1.msra.mxu0 %v899
        %945 = vmatprep.subr.mxu0 %v902
        %946 = vmatpush1.msra.mxu0 %v901
        %947 = vmatprep.subr.mxu0 %v904
        %948 = vmatpush1.msra.mxu0 %v903
        %949 = vmatprep.subr.mxu0 %v906
        %950 = vmatpush1.msra.mxu0 %v905
        %951 = vmatprep.subr.mxu0 %v908
        %952 = vmatpush1.msra.mxu0 %v907
        %953 = vmatprep.subr.mxu0 %v910
        %954 = vmatpush1.msra.mxu0 %v909
        %955 = vmatprep.subr.mxu0 %v912
        %956 = vmatpush1.msra.mxu0 %v911
        %957 = vmatprep.subr.mxu0 %v914
        %958 = vmatpush1.msra.mxu0 %v913
        %959 = vmatprep.subr.mxu0 %v916
        %960 = vmatpush1.msra.mxu0 %v915
        %961 = vmatprep.subr.mxu0 %v918
        %962 = vmatpush1.msra.mxu0 %v917
        %963 = vmatprep.subr.mxu0 %v920
        %964 = vmatpush1.msra.mxu0 %v919
        %965 = vmatprep.subr.mxu0 %v922
        %966 = vmatpush1.msra.mxu0 %v921
        %967 = vmatprep.subr.mxu0 %v924
        %968 = vmatpush1.msra.mxu0 %v923
        %969 = vmatprep.subr.mxu0 %v926
        %970 = vmatpush1.msra.mxu0 %v925
        %971 = vmatprep.subr.mxu0 %v928
        %972 = vmatpush1.msra.mxu0 %v927
        %973 = vmatprep.subr.mxu0 %v930
        %974 = vmatpush1.msra.mxu0 %v929
        %975 = vmatprep.subr.mxu0 0.0
        %976 = vmatpush1.msra.mxu0 0.0
        %977 = vmatprep.subr.mxu0 0.0
        %978 = vmatpush1.msra.mxu0 0.0
        %979 = vmatprep.subr.mxu0 0.0
        %980 = vmatpush1.msra.mxu0 0.0
        %981 = vmatprep.subr.mxu0 0.0
        %982 = vmatpush1.msra.mxu0 0.0
        %983 = vmatprep.subr.mxu0 0.0
        %984 = vmatpush1.msra.mxu0 0.0
        %985 = vmatprep.subr.mxu0 0.0
        %986 = vmatpush1.msra.mxu0 0.0
        %987 = vmatprep.subr.mxu0 0.0
        %988 = vmatpush1.msra.mxu0 0.0
        %989 = vmatprep.subr.mxu0 0.0
        %990 = vmatpush1.msra.mxu0 0.0
        %991 = vmatprep.subr.mxu0 0.0
        %992 = vmatpush1.msra.mxu0 0.0
        %993 = vmatprep.subr.mxu0 0.0
        %994 = vmatpush1.msra.mxu0 0.0
        %995 = vmatprep.subr.mxu0 0.0
        %996 = vmatpush1.msra.mxu0 0.0
        %997 = vmatprep.subr.mxu0 0.0
        %998 = vmatpush1.msra.mxu0 0.0
        %999 = vmatprep.subr.mxu0 0.0
        %1000 = vmatpush1.msra.mxu0 0.0
        %1001 = vmatprep.subr.mxu0 0.0
        %1002 = vmatpush1.msra.mxu0 0.0
        %1003 = vmatprep.subr.mxu0 0.0
        %1004 = vmatpush1.msra.mxu0 0.0
        %1005 = vmatprep.subr.mxu0 0.0
        %1006 = vmatpush1.msra.mxu0 0.0
        %1007 = vmatprep.mubr.f32.mxu0 0.0
        %1008 = vmatmul.mubr.f32.gmra.mrb[0].mxu0 %v898
        %v1009 = vpop.f32.mrb[0].mxu0
        %v1010 = vadd.f32 %v936, %v1009
        %v1011 = vpop.f32.mrb[0].mxu0
        %v1012 = vadd.f32 %v940, %v1011
        %1013 = vdwg.mxu0
        %v1014 = vmax.f32 %v1010, 0.0
        %v1015 = vmax.f32 %v1012, 0.0
        %v1016 = vld [vmem:[#allocation11] sm:$0xff]
        %v1017 = vld [vmem:[#allocation11 + $0x8] sm:$0xff]
        %v1018 = vld [vmem:[#allocation11 + $0x10] sm:$0xff]
        %v1019 = vld [vmem:[#allocation11 + $0x18] sm:$0xff]
        %v1020 = vld [vmem:[#allocation11 + $0x20] sm:$0xff]
        %v1021 = vld [vmem:[#allocation11 + $0x28] sm:$0xff]
        %v1022 = vld [vmem:[#allocation11 + $0x30] sm:$0xff]
        %v1023 = vld [vmem:[#allocation11 + $0x38] sm:$0xff]
        %v1024 = vld [vmem:[#allocation11 + $0x40] sm:$0xff]
        %v1025 = vld [vmem:[#allocation11 + $0x48] sm:$0xff]
        %v1026 = vld [vmem:[#allocation11 + $0x50] sm:$0xff]
        %v1027 = vld [vmem:[#allocation11 + $0x58] sm:$0xff]
        %v1028 = vld [vmem:[#allocation11 + $0x60] sm:$0xff]
        %v1029 = vld [vmem:[#allocation11 + $0x68] sm:$0xff]
        %v1030 = vld [vmem:[#allocation11 + $0x70] sm:$0xff]
        %v1031 = vld [vmem:[#allocation11 + $0x78] sm:$0xff]
        %v1032 = vld [vmem:[#allocation11 + $0x80] sm:$0xff]
        %v1033 = vld [vmem:[#allocation11 + $0x88] sm:$0xff]
        %v1034 = vld [vmem:[#allocation11 + $0x90] sm:$0xff]
        %v1035 = vld [vmem:[#allocation11 + $0x98] sm:$0xff]
        %v1036 = vld [vmem:[#allocation11 + $0xa0] sm:$0xff]
        %v1037 = vld [vmem:[#allocation11 + $0xa8] sm:$0xff]
        %v1038 = vld [vmem:[#allocation11 + $0xb0] sm:$0xff]
        %v1039 = vld [vmem:[#allocation11 + $0xb8] sm:$0xff]
        %v1040 = vld [vmem:[#allocation11 + $0xc0] sm:$0xff]
        %v1041 = vld [vmem:[#allocation11 + $0xc8] sm:$0xff]
        %v1042 = vld [vmem:[#allocation11 + $0xd0] sm:$0xff]
        %v1043 = vld [vmem:[#allocation11 + $0xd8] sm:$0xff]
        %v1044 = vld [vmem:[#allocation11 + $0xe0] sm:$0xff]
        %v1045 = vld [vmem:[#allocation11 + $0xe8] sm:$0xff]
        %v1046 = vld [vmem:[#allocation11 + $0xf0] sm:$0xff]
        %v1047 = vld [vmem:[#allocation11 + $0xf8] sm:$0xff]
        %v1048 = vld [vmem:[#allocation11 + $0x100] sm:$0xff]
        %v1049 = vld [vmem:[#allocation11 + $0x108] sm:$0xff]
        %v1050 = vld [vmem:[#allocation11 + $0x110] sm:$0xff]
        %v1051 = vld [vmem:[#allocation11 + $0x118] sm:$0xff]
        %v1052 = vld [vmem:[#allocation11 + $0x120] sm:$0xff]
        %v1053 = vld [vmem:[#allocation11 + $0x128] sm:$0xff]
        %v1054 = vld [vmem:[#allocation11 + $0x130] sm:$0xff]
        %v1055 = vld [vmem:[#allocation11 + $0x138] sm:$0xff]
        %v1056 = vld [vmem:[#allocation11 + $0x140] sm:$0xff]
        %v1057 = vld [vmem:[#allocation11 + $0x148] sm:$0xff]
        %v1058 = vld [vmem:[#allocation11 + $0x150] sm:$0xff]
        %v1059 = vld [vmem:[#allocation11 + $0x158] sm:$0xff]
        %v1060 = vld [vmem:[#allocation11 + $0x160] sm:$0xff]
        %v1061 = vld [vmem:[#allocation11 + $0x168] sm:$0xff]
        %v1062 = vld [vmem:[#allocation11 + $0x170] sm:$0xff]
        %v1063 = vld [vmem:[#allocation11 + $0x178] sm:$0xff]
        %v1064 = vld [vmem:[#allocation11 + $0x180] sm:$0xff]
        %v1065 = vld [vmem:[#allocation11 + $0x188] sm:$0xff]
        %v1066 = vld [vmem:[#allocation11 + $0x190] sm:$0xff]
        %v1067 = vld [vmem:[#allocation11 + $0x198] sm:$0xff]
        %v1068 = vld [vmem:[#allocation11 + $0x1a0] sm:$0xff]
        %v1069 = vld [vmem:[#allocation11 + $0x1a8] sm:$0xff]
        %v1070 = vld [vmem:[#allocation11 + $0x1b0] sm:$0xff]
        %v1071 = vld [vmem:[#allocation11 + $0x1b8] sm:$0xff]
        %v1072 = vld [vmem:[#allocation11 + $0x1c0] sm:$0xff]
        %v1073 = vld [vmem:[#allocation11 + $0x1c8] sm:$0xff]
        %v1074 = vld [vmem:[#allocation11 + $0x1d0] sm:$0xff]
        %v1075 = vld [vmem:[#allocation11 + $0x1d8] sm:$0xff]
        %v1076 = vld [vmem:[#allocation11 + $0x1e0] sm:$0xff]
        %v1077 = vld [vmem:[#allocation11 + $0x1e8] sm:$0xff]
        %v1078 = vld [vmem:[#allocation11 + $0x1f0] sm:$0xff]
        %v1079 = vld [vmem:[#allocation11 + $0x1f8] sm:$0xff]
        %v1080 = vld [vmem:[%s10] sm:$0x3]
        %v1082 = vlaneseq
        %v1083 = vshrl.u32 %v1082, 7
        %v1084 = vsub.s32 0, %v1083
        %v1085 = vrot.slane %v1080, %v1084
        %v1086 = vlaneseq
        %v1087 = vshrl.u32 %v1086, 7
        %v1088 = vsub.s32 1, %v1087
        %v1089 = vrot.slane %v1080, %v1088
        %1092 = vmatprep.subr.mxu0 %v1017
        %1093 = vmatpush1.msra.mxu0 %v1016
        %1094 = vmatprep.subr.mxu0 %v1019
        %1095 = vmatpush1.msra.mxu0 %v1018
        %1096 = vmatprep.subr.mxu0 %v1021
        %1097 = vmatpush1.msra.mxu0 %v1020
        %1098 = vmatprep.subr.mxu0 %v1023
        %1099 = vmatpush1.msra.mxu0 %v1022
        %1100 = vmatprep.subr.mxu0 %v1025
        %1101 = vmatpush1.msra.mxu0 %v1024
        %1102 = vmatprep.subr.mxu0 %v1027
        %1103 = vmatpush1.msra.mxu0 %v1026
        %1104 = vmatprep.subr.mxu0 %v1029
        %1105 = vmatpush1.msra.mxu0 %v1028
        %1106 = vmatprep.subr.mxu0 %v1031
        %1107 = vmatpush1.msra.mxu0 %v1030
        %1108 = vmatprep.subr.mxu0 %v1033
        %1109 = vmatpush1.msra.mxu0 %v1032
        %1110 = vmatprep.subr.mxu0 %v1035
        %1111 = vmatpush1.msra.mxu0 %v1034
        %1112 = vmatprep.subr.mxu0 %v1037
        %1113 = vmatpush1.msra.mxu0 %v1036
        %1114 = vmatprep.subr.mxu0 %v1039
        %1115 = vmatpush1.msra.mxu0 %v1038
        %1116 = vmatprep.subr.mxu0 %v1041
        %1117 = vmatpush1.msra.mxu0 %v1040
        %1118 = vmatprep.subr.mxu0 %v1043
        %1119 = vmatpush1.msra.mxu0 %v1042
        %1120 = vmatprep.subr.mxu0 %v1045
        %1121 = vmatpush1.msra.mxu0 %v1044
        %1122 = vmatprep.subr.mxu0 %v1047
        %1123 = vmatpush1.msra.mxu0 %v1046
        %1124 = vmatprep.subr.mxu0 %v1049
        %1125 = vmatpush1.msra.mxu0 %v1048
        %1126 = vmatprep.subr.mxu0 %v1051
        %1127 = vmatpush1.msra.mxu0 %v1050
        %1128 = vmatprep.subr.mxu0 %v1053
        %1129 = vmatpush1.msra.mxu0 %v1052
        %1130 = vmatprep.subr.mxu0 %v1055
        %1131 = vmatpush1.msra.mxu0 %v1054
        %1132 = vmatprep.subr.mxu0 %v1057
        %1133 = vmatpush1.msra.mxu0 %v1056
        %1134 = vmatprep.subr.mxu0 %v1059
        %1135 = vmatpush1.msra.mxu0 %v1058
        %1136 = vmatprep.subr.mxu0 %v1061
        %1137 = vmatpush1.msra.mxu0 %v1060
        %1138 = vmatprep.subr.mxu0 %v1063
        %1139 = vmatpush1.msra.mxu0 %v1062
        %1140 = vmatprep.subr.mxu0 %v1065
        %1141 = vmatpush1.msra.mxu0 %v1064
        %1142 = vmatprep.subr.mxu0 %v1067
        %1143 = vmatpush1.msra.mxu0 %v1066
        %1144 = vmatprep.subr.mxu0 %v1069
        %1145 = vmatpush1.msra.mxu0 %v1068
        %1146 = vmatprep.subr.mxu0 %v1071
        %1147 = vmatpush1.msra.mxu0 %v1070
        %1148 = vmatprep.subr.mxu0 %v1073
        %1149 = vmatpush1.msra.mxu0 %v1072
        %1150 = vmatprep.subr.mxu0 %v1075
        %1151 = vmatpush1.msra.mxu0 %v1074
        %1152 = vmatprep.subr.mxu0 %v1077
        %1153 = vmatpush1.msra.mxu0 %v1076
        %1154 = vmatprep.subr.mxu0 %v1079
        %1155 = vmatpush1.msra.mxu0 %v1078
        %1156 = vmatprep.mubr.f32.mxu0 %v1015
        %1157 = vmatmul.mubr.f32.gmra.mrb[0].mxu0 %v1014
        %v1158 = vpop.f32.mrb[0].mxu0
        %v1159 = vadd.f32 %v1085, %v1158
        %v1160 = vpop.f32.mrb[0].mxu0
        %v1161 = vadd.f32 %v1089, %v1160
        %1162 = vdwg.mxu0
        %v1163 = vmax.f32 %v1159, 0.0
        %v1164 = vmax.f32 %v1161, 0.0
        %v1165 = vld [vmem:[#allocation13] sm:$0xff]
        %v1166 = vld [vmem:[#allocation13 + $0x8] sm:$0xff]
        %v1167 = vld [vmem:[#allocation13 + $0x10] sm:$0xff]
        %v1168 = vld [vmem:[#allocation13 + $0x18] sm:$0xff]
        %v1169 = vld [vmem:[#allocation13 + $0x20] sm:$0xff]
        %v1170 = vld [vmem:[#allocation13 + $0x28] sm:$0xff]
        %v1171 = vld [vmem:[#allocation13 + $0x30] sm:$0xff]
        %v1172 = vld [vmem:[#allocation13 + $0x38] sm:$0xff]
        %v1173 = vld [vmem:[#allocation13 + $0x40] sm:$0xff]
        %v1174 = vld [vmem:[#allocation13 + $0x48] sm:$0xff]
        %v1175 = vld [vmem:[#allocation13 + $0x50] sm:$0xff]
        %v1176 = vld [vmem:[#allocation13 + $0x58] sm:$0xff]
        %v1177 = vld [vmem:[#allocation13 + $0x60] sm:$0xff]
        %v1178 = vld [vmem:[#allocation13 + $0x68] sm:$0xff]
        %v1179 = vld [vmem:[#allocation13 + $0x70] sm:$0xff]
        %v1180 = vld [vmem:[#allocation13 + $0x78] sm:$0xff]
        %v1181 = vld [vmem:[#allocation13 + $0x80] sm:$0xff]
        %v1182 = vld [vmem:[#allocation13 + $0x88] sm:$0xff]
        %v1183 = vld [vmem:[#allocation13 + $0x90] sm:$0xff]
        %v1184 = vld [vmem:[#allocation13 + $0x98] sm:$0xff]
        %v1185 = vld [vmem:[#allocation13 + $0xa0] sm:$0xff]
        %v1186 = vld [vmem:[#allocation13 + $0xa8] sm:$0xff]
        %v1187 = vld [vmem:[#allocation13 + $0xb0] sm:$0xff]
        %v1188 = vld [vmem:[#allocation13 + $0xb8] sm:$0xff]
        %v1189 = vld [vmem:[#allocation13 + $0xc0] sm:$0xff]
        %v1190 = vld [vmem:[#allocation13 + $0xc8] sm:$0xff]
        %v1191 = vld [vmem:[#allocation13 + $0xd0] sm:$0xff]
        %v1192 = vld [vmem:[#allocation13 + $0xd8] sm:$0xff]
        %v1193 = vld [vmem:[#allocation13 + $0xe0] sm:$0xff]
        %v1194 = vld [vmem:[#allocation13 + $0xe8] sm:$0xff]
        %v1195 = vld [vmem:[#allocation13 + $0xf0] sm:$0xff]
        %v1196 = vld [vmem:[#allocation13 + $0xf8] sm:$0xff]
        %v1197 = vld [vmem:[%s12] sm:$0x1]
        %v1199 = vlaneseq
        %v1200 = vshrl.u32 %v1199, 7
        %v1201 = vsub.s32 0, %v1200
        %v1202 = vrot.slane %v1197, %v1201
        %1204 = vmatprep.subr.mxu0 0.0
        %1205 = vmatpush1.msra.mxu0 %v1165
        %1206 = vmatprep.subr.mxu0 0.0
        %1207 = vmatpush1.msra.mxu0 %v1166
        %1208 = vmatprep.subr.mxu0 0.0
        %1209 = vmatpush1.msra.mxu0 %v1167
        %1210 = vmatprep.subr.mxu0 0.0
        %1211 = vmatpush1.msra.mxu0 %v1168
        %1212 = vmatprep.subr.mxu0 0.0
        %1213 = vmatpush1.msra.mxu0 %v1169
        %1214 = vmatprep.subr.mxu0 0.0
        %1215 = vmatpush1.msra.mxu0 %v1170
        %1216 = vmatprep.subr.mxu0 0.0
        %1217 = vmatpush1.msra.mxu0 %v1171
        %1218 = vmatprep.subr.mxu0 0.0
        %1219 = vmatpush1.msra.mxu0 %v1172
        %1220 = vmatprep.subr.mxu0 0.0
        %1221 = vmatpush1.msra.mxu0 %v1173
        %1222 = vmatprep.subr.mxu0 0.0
        %1223 = vmatpush1.msra.mxu0 %v1174
        %1224 = vmatprep.subr.mxu0 0.0
        %1225 = vmatpush1.msra.mxu0 %v1175
        %1226 = vmatprep.subr.mxu0 0.0
        %1227 = vmatpush1.msra.mxu0 %v1176
        %1228 = vmatprep.subr.mxu0 0.0
        %1229 = vmatpush1.msra.mxu0 %v1177
        %1230 = vmatprep.subr.mxu0 0.0
        %1231 = vmatpush1.msra.mxu0 %v1178
        %1232 = vmatprep.subr.mxu0 0.0
        %1233 = vmatpush1.msra.mxu0 %v1179
        %1234 = vmatprep.subr.mxu0 0.0
        %1235 = vmatpush1.msra.mxu0 %v1180
        %1236 = vmatprep.subr.mxu0 0.0
        %1237 = vmatpush1.msra.mxu0 %v1181
        %1238 = vmatprep.subr.mxu0 0.0
        %1239 = vmatpush1.msra.mxu0 %v1182
        %1240 = vmatprep.subr.mxu0 0.0
        %1241 = vmatpush1.msra.mxu0 %v1183
        %1242 = vmatprep.subr.mxu0 0.0
        %1243 = vmatpush1.msra.mxu0 %v1184
        %1244 = vmatprep.subr.mxu0 0.0
        %1245 = vmatpush1.msra.mxu0 %v1185
        %1246 = vmatprep.subr.mxu0 0.0
        %1247 = vmatpush1.msra.mxu0 %v1186
        %1248 = vmatprep.subr.mxu0 0.0
        %1249 = vmatpush1.msra.mxu0 %v1187
        %1250 = vmatprep.subr.mxu0 0.0
        %1251 = vmatpush1.msra.mxu0 %v1188
        %1252 = vmatprep.subr.mxu0 0.0
        %1253 = vmatpush1.msra.mxu0 %v1189
        %1254 = vmatprep.subr.mxu0 0.0
        %1255 = vmatpush1.msra.mxu0 %v1190
        %1256 = vmatprep.subr.mxu0 0.0
        %1257 = vmatpush1.msra.mxu0 %v1191
        %1258 = vmatprep.subr.mxu0 0.0
        %1259 = vmatpush1.msra.mxu0 %v1192
        %1260 = vmatprep.subr.mxu0 0.0
        %1261 = vmatpush1.msra.mxu0 %v1193
        %1262 = vmatprep.subr.mxu0 0.0
        %1263 = vmatpush1.msra.mxu0 %v1194
        %1264 = vmatprep.subr.mxu0 0.0
        %1265 = vmatpush1.msra.mxu0 %v1195
        %1266 = vmatprep.subr.mxu0 0.0
        %1267 = vmatpush1.msra.mxu0 %v1196
        %1268 = vmatprep.mubr.f32.mxu0 %v1164
        %1269 = vmatmul.mubr.f32.gmra.mrb[0].mxu0 %v1163
        %v1270 = vpop.f32.mrb[0].mxu0
        %v1271 = vadd.f32 %v1202, %v1270
        %v1272 = vpop.f32.mrb[0].mxu0
        %1273 = vdwg.mxu0
        %1274 = vst [vmem:[%s543] sm:$0xff] %v1271
        %s1275 = sand.u32 %s319, 1
        %s1276 = scalar_lea.sflag [#allocation4], %s1275
        %s1277 = sand.u32 %s319, 1
        %s1278 = smul.addr %s1277, 8
        %s1279 = scalar_lea.vmem [#allocation14], %s1278
        // Predicated region
        $region101: #{tpu_custom_call.1} parent=71 // pred_check
          %p1280 = pneg %p329
        $region102: #{tpu_custom_call.1} parent=71 // pred_check_branch
          %1282 = sbr.rel (%p1280) target = $region104
        $region103: #{tpu_custom_call.1} parent=71 // pred_region
          %s1284 = ssub.s32 128, 128
          %1285 = vsyncadd %s1276, %s1284
          %s1286 = smul.addr %s33, 128
          %s1287 = scalar_lea.hbm %s13, %s1286
          %s1289 = sshll.u32 %s1279, 4
          %s1290 = int_to_ptr.vmem [resolvable:$true] %s1289
          %1292 = dma.vmem_to_hbm [thread:$0]  %s1290, 128, %s1287, %s1276
        $region104: #{tpu_custom_call.1} parent=71 // pred_fallthru
          _
      $region72: #{tpu_custom_call.1} parent=5 // pred_fallthru
        _
      %p1293 = scmp.le.s32.totalorder 2, %s28
      // Predicated region
      $region105: #{tpu_custom_call.1} parent=5 // pred_check
        %p1294 = pneg %p1293
      $region106: #{tpu_custom_call.1} parent=5 // pred_check_branch
        %1296 = sbr.rel (%p1294) target = $region108
      $region107: #{tpu_custom_call.1} parent=5 // pred_region
        %s1297 = ssub.s32 %s28, 2
        // Predicated region
        $region109: #{tpu_custom_call.1} parent=107 // pred_check
          %p1298 = pneg %p335
        $region110: #{tpu_custom_call.1} parent=107 // pred_check_branch
          %1300 = sbr.rel (%p1298) target = $region112
        $region111: #{tpu_custom_call.1} parent=107 // pred_region
          %s1301 = sand.u32 %s320, 1
          %s1302 = scalar_lea.sflag [#allocation4], %s1301
          %s1303 = sand.u32 %s320, 1
          %s1304 = smul.addr %s1303, 8
          %s1305 = scalar_lea.vmem [#allocation14], %s1304
          %1306 = dma.done %s1302, 128
        $region112: #{tpu_custom_call.1} parent=107 // pred_fallthru
          _
      $region108: #{tpu_custom_call.1} parent=5 // pred_fallthru
        _
    $region6: #{tpu_custom_call.1} parent=1 // loop_footer
      %s32 = sadd.s32 1, %s28
    $region7: #{tpu_custom_call.1} parent=1 // loop_footer_branch
      %27 = sbr.rel target = $region3
    $region8: #{tpu_custom_call.1} parent=1 // loop_exit
      _
    %1307 = vsyncpa [#allocation3], 1
    %s1308 = scalar_lea.sflag [#allocation3], 1
    %1309 = vsyncpa %s1308, 1
    %1310 = vsyncpa [#allocation6], 1
    %1311 = vsyncpa [#allocation9], 1
    %1312 = vsyncpa [#allocation12], 1
    %1313 = vsyncpa [#allocation4], 1
    %s1314 = scalar_lea.sflag [#allocation4], 1
    %1315 = vsyncpa %s1314, 1

</llo_original>
